<compile_context>
chip_gen: v6e
topology: v6e:2x2x1
jax: 0.10.0
libtpu: 0.0.40
codegen_flags: <defaults>
</compile_context>

<pallas_src>
import jax
import jax.numpy as jnp
from jax.experimental import pallas as pl
from jax.experimental.pallas import tpu as pltpu


def _pick_tile(n: int, cap: int) -> int:
    """Largest lane-aligned (multiple of 128) tile dividing n, capped at `cap`.
    Falls back to the full extent (always a legal block shape)."""
    t = (cap // 128) * 128
    while t >= 128:
        if n % t == 0:
            return t
        t -= 128
    return n


def _make_kernel(cq: int, cache_kv: bool, pv_bf16: bool):
    """Build the kernel body.  cq = C // 4 (static), cache_kv / pv_bf16 static flags."""

    def kernel(xq_ref, xk_ref, wq_ref, wkv_ref, bq_ref, bkv_ref, gamma_ref,
               o_ref, q_sc, m_sc, l_sc, acc_sc, *rest):
        # xq_ref : (1, C, TQ)  query-side slab of x (resident across the key axis)
        # xk_ref : (1, C, TK)  key/value-side slab of x
        # wq_ref : (Cq, C)     wkv_ref: (Cq+C, C) = [wk; wv]
        # bq_ref : (Cq, 1)     bkv_ref: (Cq+C, 1), gamma_ref: (1, 1)
        # o_ref  : (1, C, TQ)
        # q_sc   : (Cq, TQ) cached projected queries      (lane-dense)
        # m_sc   : (1, TQ)  running row max               (lane-dense)
        # l_sc   : (1, TQ)  running softmax denominator   (lane-dense)
        # acc_sc : (C, TQ)  running un-normalized output  (lane-dense)
        # rest   : (kv_sc,) with kv_sc (num_kv, Cq+C, TK) when cache_kv
        qi = pl.program_id(1)
        ki = pl.program_id(2)
        num_kv = pl.num_programs(2)

        @pl.when(ki == 0)
        def _init():
            q_sc[...] = (jnp.dot(wq_ref[...], xq_ref[0],
                                 preferred_element_type=jnp.float32)
                         + bq_ref[...])                                   # (Cq, TQ)
            m_sc[...] = jnp.full_like(m_sc, -jnp.inf)
            l_sc[...] = jnp.zeros_like(l_sc)
            acc_sc[...] = jnp.zeros_like(acc_sc)

        # Key/value projection: one stacked MXU matmul, cached across query blocks.
        if cache_kv:
            kv_sc, = rest

            @pl.when(qi == 0)
            def _project():
                kv_sc[ki] = (jnp.dot(wkv_ref[...], xk_ref[0],
                                     preferred_element_type=jnp.float32)
                             + bkv_ref[...])                              # (Cq+C, TK)

            kv_blk = kv_sc[ki]
        else:
            kv_blk = (jnp.dot(wkv_ref[...], xk_ref[0],
                              preferred_element_type=jnp.float32)
                      + bkv_ref[...])

        # Row 8 (= Cq for f32, C a multiple of 32) is a sublane-tile boundary,
        # so these slices are cheap.  The (Cq, TK) -> (TK, Cq) transpose is tiny
        # (Cq rows) and keeps the energy matmul in the standard MXU orientation.
        k_t = kv_blk[:cq].T                                               # (TK, Cq)
        v = kv_blk[cq:]                                                   # (C, TK)

        # Energy tile, transposed (lane-dense in TQ): s[j, i] = sum_c k[c,j] q[c,i]
        s = jnp.dot(k_t, q_sc[...], preferred_element_type=jnp.float32)  # (TK, TQ)

        # Online softmax along the key (sublane) axis.
        m_prev = m_sc[...]                                                # (1, TQ)
        m_new = jnp.maximum(m_prev, jnp.max(s, axis=0, keepdims=True))
        alpha = jnp.exp(m_prev - m_new)                                   # (1, TQ)
        p = jnp.exp(s - m_new)                                            # (TK, TQ)
        l_sc[...] = alpha * l_sc[...] + jnp.sum(p, axis=0, keepdims=True)

        if pv_bf16:
            # bf16 MXU operands, f32 accumulation (energy path stays f32).
            p = p.astype(jnp.bfloat16)
            v = v.astype(jnp.bfloat16)
        # pv[c, i] = sum_j v[c, j] * p[j, i]
        pv = jnp.dot(v, p, preferred_element_type=jnp.float32)            # (C, TQ)
        acc_sc[...] = alpha * acc_sc[...] + pv
        m_sc[...] = m_new

        @pl.when(ki == num_kv - 1)
        def _finalize():
            inv_l = pl.reciprocal(l_sc[...], approx=True)                 # EUP slot
            inv_l = inv_l * (2.0 - l_sc[...] * inv_l)  # one Newton step -> full f32 acc.
            o_ref[0] = (gamma_ref[...] * (acc_sc[...] * inv_l)
                        + xq_ref[0]).astype(o_ref.dtype)

    return kernel


def global_attention_block2(x, wq, bq, wk, bk, wv, bv, gamma, *,
                            max_tq: int = 256, max_tk: int = 512,
                            pv_bf16: bool = True,
                            kv_cache_budget_bytes: int = 8 * 1024 * 1024):
    """x: (B, C, H, W) f32; wq/wk: (C//4, C); wv: (C, C); bq/bk: (C//4,); bv: (C,);
    gamma: scalar.  Returns (B, C, H, W) f32."""
    B, C, H, W = x.shape
    Cq = wq.shape[0]
    assert C >= 4 and wq.shape == (Cq, C) and wk.shape == (Cq, C) and wv.shape == (C, C)
    assert bq.shape == (Cq,) and bk.shape == (Cq,) and bv.shape == (C,)
    N = H * W

    x_flat = x.reshape(B, C, N).astype(jnp.float32)
    tq = _pick_tile(N, max_tq)        # query tile (lane dim of all persistent state)
    tk = _pick_tile(N, max_tk)        # key tile (contraction depth of the PV matmul)
    if max(tq, tk) > 2048:
        # Fallback tile == N would materialize an N x N energy tile; pad H*W so
        # it has a multiple-of-128 divisor (key padding would need masking).
        raise NotImplementedError(
            "H*W has no multiple-of-128 divisor <= 2048; pad the spatial extent.")
    num_q = N // tq
    num_kv = N // tk

    wq2 = wq.astype(jnp.float32)
    wkv = jnp.concatenate([wk, wv], axis=0).astype(jnp.float32)           # (Cq+C, C)
    bq2 = bq.reshape(Cq, 1).astype(jnp.float32)
    bkv = jnp.concatenate([bk, bv], axis=0).reshape(Cq + C, 1).astype(jnp.float32)
    gamma2 = jnp.asarray(gamma, jnp.float32).reshape(1, 1)

    # Per-batch projected k/v cache: (num_kv, Cq+C, TK) f32 in VMEM scratch.
    cache_bytes = num_kv * (Cq + C) * tk * 4
    cache_kv = cache_bytes <= kv_cache_budget_bytes

    scratch = [
        pltpu.VMEM((Cq, tq), jnp.float32),   # cached q          (lane-dense)
        pltpu.VMEM((1, tq), jnp.float32),    # running max       (lane-dense)
        pltpu.VMEM((1, tq), jnp.float32),    # running denom     (lane-dense)
        pltpu.VMEM((C, tq), jnp.float32),    # running output    (lane-dense)
    ]
    if cache_kv:
        scratch.append(pltpu.VMEM((num_kv, Cq + C, tk), jnp.float32))

    kernel = _make_kernel(Cq, cache_kv, pv_bf16)

    kv_proj_sweeps = 1 if cache_kv else num_q
    cost = pl.CostEstimate(
        flops=int(2 * B * (N * C * Cq
                           + kv_proj_sweeps * N * C * (Cq + C)
                           + N * N * (Cq + C))),
        transcendentals=int(B * N * (N + num_kv)),
        bytes_accessed=int(4 * (B * C * N * (2 + num_q)
                                + C * (Cq + Cq + C) + Cq + C + Cq + C)),
    )

    # The k/v cache creates a dependency across the query axis (filled at qi==0),
    # so qi must be "arbitrary" when caching; batch stays "parallel" (megacore).
    dim_sem = ("parallel", "arbitrary" if cache_kv else "parallel", "arbitrary")

    out = pl.pallas_call(
        kernel,
        out_shape=jax.ShapeDtypeStruct((B, C, N), jnp.float32),
        grid_spec=pltpu.PrefetchScalarGridSpec(
            num_scalar_prefetch=0,
            grid=(B, num_q, num_kv),
            in_specs=[
                pl.BlockSpec((1, C, tq), lambda b, qi, ki: (b, 0, qi)),    # x (query side)
                pl.BlockSpec((1, C, tk), lambda b, qi, ki: (b, 0, ki)),    # x (key/value side)
                pl.BlockSpec((Cq, C), lambda b, qi, ki: (0, 0)),           # wq
                pl.BlockSpec((Cq + C, C), lambda b, qi, ki: (0, 0)),       # [wk; wv]
                pl.BlockSpec((Cq, 1), lambda b, qi, ki: (0, 0)),           # bq
                pl.BlockSpec((Cq + C, 1), lambda b, qi, ki: (0, 0)),       # [bk; bv]
                pl.BlockSpec((1, 1), lambda b, qi, ki: (0, 0)),            # gamma
            ],
            out_specs=pl.BlockSpec((1, C, tq), lambda b, qi, ki: (b, 0, qi)),
            scratch_shapes=scratch,
        ),
        compiler_params=pltpu.CompilerParams(dimension_semantics=dim_sem),
        cost_estimate=cost,
    )(x_flat, x_flat, wq2, wkv, bq2, bkv, gamma2)

    return out.reshape(B, C, H, W)


def global_attention_block2_ref(x, wq, bq, wk, bk, wv, bv, gamma):
    """Pure-JAX reference mirroring the PyTorch forward."""
    B, C, H, W = x.shape
    N = H * W
    xf = x.reshape(B, C, N)
    hp = jax.lax.Precision.HIGHEST
    q = jnp.einsum("oc,bcn->bon", wq, xf, precision=hp) + bq[None, :, None]
    k = jnp.einsum("oc,bcn->bon", wk, xf, precision=hp) + bk[None, :, None]
    v = jnp.einsum("oc,bcn->bon", wv, xf, precision=hp) + bv[None, :, None]
    energy = jnp.einsum("bci,bcj->bij", q, k, precision=hp)       # (B, N, N)
    attn = jax.nn.softmax(energy, axis=-1)
    out = jnp.einsum("bcj,bij->bci", v, attn, precision=hp)       # (B, C, N)
    out = gamma * out + xf
    return out.reshape(B, C, H, W)


if __name__ == "__main__":
    # N = 1024 -> tq=256, tk=512 -> grid (2, 4, 2): exercises the multi-block
    # online softmax AND the cached-kv reuse path (qi > 0).
    B, C, H, W = 2, 32, 32, 32
    Cq = C // 4

    key = jax.random.PRNGKey(0)
    kx, k1, k2, k3, k4, k5, k6 = jax.random.split(key, 7)

    x = jax.random.normal(kx, (B, C, H, W), dtype=jnp.float32)
    wq = jax.random.normal(k1, (Cq, C), dtype=jnp.float32) / jnp.sqrt(C)
    bq = jax.random.normal(k2, (Cq,), dtype=jnp.float32) * 0.1
    wk = jax.random.normal(k3, (Cq, C), dtype=jnp.float32) / jnp.sqrt(C)
    bk = jax.random.normal(k4, (Cq,), dtype=jnp.float32) * 0.1
    wv = jax.random.normal(k5, (C, C), dtype=jnp.float32) / jnp.sqrt(C)
    bv = jax.random.normal(k6, (C,), dtype=jnp.float32) * 0.1
    # PyTorch inits gamma to 0 (output == x); use a nonzero value so the
    # attention path is actually exercised by the check.
    gamma = jnp.float32(0.7)

    ref = jax.block_until_ready(
        global_attention_block2_ref(x, wq, bq, wk, bk, wv, bv, gamma))

    # Full-f32 MXU path: tight tolerance.
    out_f32 = jax.block_until_ready(
        global_attention_block2(x, wq, bq, wk, bk, wv, bv, gamma, pv_bf16=False))
    assert out_f32.shape == (B, C, H, W)
    err_f32 = float(jnp.max(jnp.abs(out_f32 - ref)))
    assert jnp.allclose(out_f32, ref, atol=2e-3, rtol=2e-3), \
        f"f32 path max abs err {err_f32}"

    # Default path: bf16 operands on the P@V matmul (f32 accumulation, f32
    # energy/softmax) -> standard flash-attention-style tolerance.
    out = jax.block_until_ready(
        global_attention_block2(x, wq, bq, wk, bk, wv, bv, gamma))
    assert out.shape == (B, C, H, W)
    err = float(jnp.max(jnp.abs(out - ref)))
    assert jnp.allclose(out, ref, atol=1e-2, rtol=1e-2), \
        f"bf16-PV path max abs err {err}"

    print("KERNEL_OK")
</pallas_src>

<mosaic_0001>
module attributes {stable_mosaic.version = 11 : i64} {
  func.func @kernel(%arg0: i32, %arg1: i32, %arg2: i32, %arg3: memref<1x32x256xf32, #tpu.memory_space<vmem>>, %arg4: memref<1x32x512xf32, #tpu.memory_space<vmem>>, %arg5: memref<8x32xf32, #tpu.memory_space<vmem>>, %arg6: memref<40x32xf32, #tpu.memory_space<vmem>>, %arg7: memref<8x1xf32, #tpu.memory_space<vmem>>, %arg8: memref<40x1xf32, #tpu.memory_space<vmem>>, %arg9: memref<1x1xf32, #tpu.memory_space<vmem>>, %arg10: memref<1x32x256xf32, #tpu.memory_space<vmem>>, %arg11: memref<8x256xf32, #tpu.memory_space<vmem>>, %arg12: memref<1x256xf32, #tpu.memory_space<vmem>>, %arg13: memref<1x256xf32, #tpu.memory_space<vmem>>, %arg14: memref<32x256xf32, #tpu.memory_space<vmem>>, %arg15: memref<2x40x512xf32, #tpu.memory_space<vmem>>) attributes {dimension_semantics = [#tpu.dimension_semantics<parallel>, #tpu.dimension_semantics<arbitrary>, #tpu.dimension_semantics<arbitrary>], iteration_bounds = array<i64: 2, 4, 2>, scalar_prefetch = 0 : i64, scratch_operands = 5 : i64, tpu.core_type = #tpu.core_type<tc>, window_params = [{transform_indices = @transform_0, window_bounds = array<i64: 1, 32, 256>}, {transform_indices = @transform_1, window_bounds = array<i64: 1, 32, 512>}, {pipeline_mode = #tpu.pipeline_mode<synchronous>, transform_indices = @transform_2, window_bounds = array<i64: 8, 32>}, {pipeline_mode = #tpu.pipeline_mode<synchronous>, transform_indices = @transform_3, window_bounds = array<i64: 40, 32>}, {pipeline_mode = #tpu.pipeline_mode<synchronous>, transform_indices = @transform_4, window_bounds = array<i64: 8, 1>}, {pipeline_mode = #tpu.pipeline_mode<synchronous>, transform_indices = @transform_5, window_bounds = array<i64: 40, 1>}, {pipeline_mode = #tpu.pipeline_mode<synchronous>, transform_indices = @transform_6, window_bounds = array<i64: 1, 1>}, {transform_indices = @transform_7, window_bounds = array<i64: 1, 32, 256>}]} {
    %c0_i32 = arith.constant 0 : i32
    %0 = arith.cmpi eq, %arg2, %c0_i32 : i32
    %1 = arith.extui %0 : i1 to i32
    %c0_i32_0 = arith.constant 0 : i32
    %2 = arith.cmpi ne, %1, %c0_i32_0 : i32
    scf.if %2 {
      %c0_22 = arith.constant 0 : index
      %c0_23 = arith.constant 0 : index
      %39 = vector.load %arg5[%c0_22, %c0_23] : memref<8x32xf32, #tpu.memory_space<vmem>>, vector<8x32xf32>
      %c0_24 = arith.constant 0 : index
      %c0_25 = arith.constant 0 : index
      %c0_26 = arith.constant 0 : index
      %40 = vector.load %arg3[%c0_24, %c0_25, %c0_26] : memref<1x32x256xf32, #tpu.memory_space<vmem>>, vector<1x32x256xf32>
      %41 = vector.shape_cast %40 : vector<1x32x256xf32> to vector<32x256xf32>
      %cst_27 = arith.constant dense<0.000000e+00> : vector<8x256xf32>
      %42 = tpu.matmul %39, %41, %cst_27 {dimension_numbers = #tpu.dot_dimension_numbers<[1], [0], [0], [1], [0, 0, 1, 1], [], []>} : vector<8x32xf32>, vector<32x256xf32>, vector<8x256xf32> -> vector<8x256xf32>
      %c0_28 = arith.constant 0 : index
      %c0_29 = arith.constant 0 : index
      %43 = vector.load %arg7[%c0_28, %c0_29] : memref<8x1xf32, #tpu.memory_space<vmem>>, vector<8x1xf32>
      %44 = vector.broadcast %43 : vector<8x1xf32> to vector<8x256xf32>
      %45 = arith.addf %42, %44 : vector<8x256xf32>
      %c0_30 = arith.constant 0 : index
      %c0_31 = arith.constant 0 : index
      %46 = vector.load %arg11[%c0_30, %c0_31] : memref<8x256xf32, #tpu.memory_space<vmem>>, vector<8x256xf32>
      tpu.vector_store %arg11[%c0_30, %c0_31], %45 {strides = array<i32>} : memref<8x256xf32, #tpu.memory_space<vmem>>, vector<8x256xf32>,
      %cst_32 = arith.constant 0xFF800000 : f32
      %47 = vector.broadcast %cst_32 : f32 to vector<1x256xf32>
      %c0_33 = arith.constant 0 : index
      %c0_34 = arith.constant 0 : index
      %48 = vector.load %arg12[%c0_33, %c0_34] : memref<1x256xf32, #tpu.memory_space<vmem>>, vector<1x256xf32>
      tpu.vector_store %arg12[%c0_33, %c0_34], %47 {strides = array<i32>} : memref<1x256xf32, #tpu.memory_space<vmem>>, vector<1x256xf32>,
      %cst_35 = arith.constant 0.000000e+00 : f32
      %49 = vector.broadcast %cst_35 : f32 to vector<1x256xf32>
      %c0_36 = arith.constant 0 : index
      %c0_37 = arith.constant 0 : index
      %50 = vector.load %arg13[%c0_36, %c0_37] : memref<1x256xf32, #tpu.memory_space<vmem>>, vector<1x256xf32>
      tpu.vector_store %arg13[%c0_36, %c0_37], %49 {strides = array<i32>} : memref<1x256xf32, #tpu.memory_space<vmem>>, vector<1x256xf32>,
      %cst_38 = arith.constant 0.000000e+00 : f32
      %51 = vector.broadcast %cst_38 : f32 to vector<32x256xf32>
      %c0_39 = arith.constant 0 : index
      %c0_40 = arith.constant 0 : index
      %52 = vector.load %arg14[%c0_39, %c0_40] : memref<32x256xf32, #tpu.memory_space<vmem>>, vector<32x256xf32>
      tpu.vector_store %arg14[%c0_39, %c0_40], %51 {strides = array<i32>} : memref<32x256xf32, #tpu.memory_space<vmem>>, vector<32x256xf32>,
    } else {
    }
    %c0_i32_1 = arith.constant 0 : i32
    %3 = arith.cmpi eq, %arg1, %c0_i32_1 : i32
    %4 = arith.extui %3 : i1 to i32
    %c0_i32_2 = arith.constant 0 : i32
    %5 = arith.cmpi ne, %4, %c0_i32_2 : i32
    scf.if %5 {
      %c0_22 = arith.constant 0 : index
      %c0_23 = arith.constant 0 : index
      %39 = vector.load %arg6[%c0_22, %c0_23] : memref<40x32xf32, #tpu.memory_space<vmem>>, vector<40x32xf32>
      %c0_24 = arith.constant 0 : index
      %c0_25 = arith.constant 0 : index
      %c0_26 = arith.constant 0 : index
      %40 = vector.load %arg4[%c0_24, %c0_25, %c0_26] : memref<1x32x512xf32, #tpu.memory_space<vmem>>, vector<1x32x512xf32>
      %41 = vector.shape_cast %40 : vector<1x32x512xf32> to vector<32x512xf32>
      %cst_27 = arith.constant dense<0.000000e+00> : vector<40x512xf32>
      %42 = tpu.matmul %39, %41, %cst_27 {dimension_numbers = #tpu.dot_dimension_numbers<[1], [0], [0], [1], [0, 0, 1, 1], [], []>} : vector<40x32xf32>, vector<32x512xf32>, vector<40x512xf32> -> vector<40x512xf32>
      %c0_28 = arith.constant 0 : index
      %c0_29 = arith.constant 0 : index
      %43 = vector.load %arg8[%c0_28, %c0_29] : memref<40x1xf32, #tpu.memory_space<vmem>>, vector<40x1xf32>
      %44 = vector.broadcast %43 : vector<40x1xf32> to vector<40x512xf32>
      %45 = arith.addf %42, %44 : vector<40x512xf32>
      %46 = arith.index_cast %arg2 : i32 to index
      %c0_30 = arith.constant 0 : index
      %c0_31 = arith.constant 0 : index
      %47 = vector.load %arg15[%46, %c0_30, %c0_31] : memref<2x40x512xf32, #tpu.memory_space<vmem>>, vector<1x40x512xf32>
      %48 = vector.shape_cast %47 : vector<1x40x512xf32> to vector<40x512xf32>
      %49 = vector.shape_cast %45 : vector<40x512xf32> to vector<1x40x512xf32>
      tpu.vector_store %arg15[%46, %c0_30, %c0_31], %49 {strides = array<i32>} : memref<2x40x512xf32, #tpu.memory_space<vmem>>, vector<1x40x512xf32>,
    } else {
    }
    %6 = arith.index_cast %arg2 : i32 to index
    %c0 = arith.constant 0 : index
    %c0_3 = arith.constant 0 : index
    %7 = vector.load %arg15[%6, %c0, %c0_3] : memref<2x40x512xf32, #tpu.memory_space<vmem>>, vector<1x40x512xf32>
    %8 = vector.shape_cast %7 : vector<1x40x512xf32> to vector<40x512xf32>
    %9 = vector.extract_strided_slice %8 {offsets = [0, 0], sizes = [8, 512], strides = [1, 1]} : vector<40x512xf32> to vector<8x512xf32>
    %10 = tpu.transpose %9, [1, 0] : vector<8x512xf32> -> vector<512x8xf32>
    %11 = vector.extract_strided_slice %8 {offsets = [8, 0], sizes = [32, 512], strides = [1, 1]} : vector<40x512xf32> to vector<32x512xf32>
    %c0_4 = arith.constant 0 : index
    %c0_5 = arith.constant 0 : index
    %12 = vector.load %arg11[%c0_4, %c0_5] : memref<8x256xf32, #tpu.memory_space<vmem>>, vector<8x256xf32>
    %cst = arith.constant dense<0.000000e+00> : vector<512x256xf32>
    %13 = tpu.matmul %10, %12, %cst {dimension_numbers = #tpu.dot_dimension_numbers<[1], [0], [0], [1], [0, 0, 1, 1], [], []>} : vector<512x8xf32>, vector<8x256xf32>, vector<512x256xf32> -> vector<512x256xf32>
    %c0_6 = arith.constant 0 : index
    %c0_7 = arith.constant 0 : index
    %14 = vector.load %arg12[%c0_6, %c0_7] : memref<1x256xf32, #tpu.memory_space<vmem>>, vector<1x256xf32>
    %cst_8 = arith.constant dense<0xFF800000> : vector<256xf32>
    %15 = vector.multi_reduction <maximumf>, %13, %cst_8 [0] : vector<512x256xf32> to vector<256xf32>
    %16 = vector.shape_cast %15 : vector<256xf32> to vector<1x256xf32>
    %17 = arith.maximumf %14, %16 : vector<1x256xf32>
    %18 = arith.subf %14, %17 : vector<1x256xf32>
    %19 = math.exp %18 : vector<1x256xf32>
    %20 = vector.broadcast %17 : vector<1x256xf32> to vector<512x256xf32>
    %21 = arith.subf %13, %20 : vector<512x256xf32>
    %22 = math.exp %21 : vector<512x256xf32>
    %c0_9 = arith.constant 0 : index
    %c0_10 = arith.constant 0 : index
    %23 = vector.load %arg13[%c0_9, %c0_10] : memref<1x256xf32, #tpu.memory_space<vmem>>, vector<1x256xf32>
    %24 = arith.mulf %19, %23 : vector<1x256xf32>
    %cst_11 = arith.constant dense<0.000000e+00> : vector<256xf32>
    %25 = vector.multi_reduction <add>, %22, %cst_11 [0] : vector<512x256xf32> to vector<256xf32>
    %26 = vector.shape_cast %25 : vector<256xf32> to vector<1x256xf32>
    %27 = arith.addf %24, %26 : vector<1x256xf32>
    %c0_12 = arith.constant 0 : index
    %c0_13 = arith.constant 0 : index
    %28 = vector.load %arg13[%c0_12, %c0_13] : memref<1x256xf32, #tpu.memory_space<vmem>>, vector<1x256xf32>
    tpu.vector_store %arg13[%c0_12, %c0_13], %27 {strides = array<i32>} : memref<1x256xf32, #tpu.memory_space<vmem>>, vector<1x256xf32>,
    %cst_14 = arith.constant dense<0.000000e+00> : vector<32x256xf32>
    %29 = tpu.matmul %11, %22, %cst_14 {dimension_numbers = #tpu.dot_dimension_numbers<[1], [0], [0], [1], [0, 0, 1, 1], [], []>} : vector<32x512xf32>, vector<512x256xf32>, vector<32x256xf32> -> vector<32x256xf32>
    %c0_15 = arith.constant 0 : index
    %c0_16 = arith.constant 0 : index
    %30 = vector.load %arg14[%c0_15, %c0_16] : memref<32x256xf32, #tpu.memory_space<vmem>>, vector<32x256xf32>
    %31 = vector.broadcast %19 : vector<1x256xf32> to vector<32x256xf32>
    %32 = arith.mulf %31, %30 : vector<32x256xf32>
    %33 = arith.addf %32, %29 : vector<32x256xf32>
    %c0_17 = arith.constant 0 : index
    %c0_18 = arith.constant 0 : index
    %34 = vector.load %arg14[%c0_17, %c0_18] : memref<32x256xf32, #tpu.memory_space<vmem>>, vector<32x256xf32>
    tpu.vector_store %arg14[%c0_17, %c0_18], %33 {strides = array<i32>} : memref<32x256xf32, #tpu.memory_space<vmem>>, vector<32x256xf32>,
    %c0_19 = arith.constant 0 : index
    %c0_20 = arith.constant 0 : index
    %35 = vector.load %arg12[%c0_19, %c0_20] : memref<1x256xf32, #tpu.memory_space<vmem>>, vector<1x256xf32>
    tpu.vector_store %arg12[%c0_19, %c0_20], %17 {strides = array<i32>} : memref<1x256xf32, #tpu.memory_space<vmem>>, vector<1x256xf32>,
    %c1_i32 = arith.constant 1 : i32
    %36 = arith.cmpi eq, %arg2, %c1_i32 : i32
    %37 = arith.extui %36 : i1 to i32
    %c0_i32_21 = arith.constant 0 : i32
    %38 = arith.cmpi ne, %37, %c0_i32_21 : i32
    scf.if %38 {
      %c0_22 = arith.constant 0 : index
      %c0_23 = arith.constant 0 : index
      %39 = vector.load %arg13[%c0_22, %c0_23] : memref<1x256xf32, #tpu.memory_space<vmem>>, vector<1x256xf32>
      %40 = tpu.reciprocal %39 {approx = true} : vector<1x256xf32> -> vector<1x256xf32>
      %c0_24 = arith.constant 0 : index
      %c0_25 = arith.constant 0 : index
      %41 = vector.load %arg13[%c0_24, %c0_25] : memref<1x256xf32, #tpu.memory_space<vmem>>, vector<1x256xf32>
      %42 = arith.mulf %41, %40 : vector<1x256xf32>
      %cst_26 = arith.constant 2.000000e+00 : f32
      %43 = vector.broadcast %cst_26 : f32 to vector<1x256xf32>
      %44 = arith.subf %43, %42 : vector<1x256xf32>
      %45 = arith.mulf %40, %44 : vector<1x256xf32>
      %c0_27 = arith.constant 0 : index
      %c0_28 = arith.constant 0 : index
      %46 = vector.load %arg9[%c0_27, %c0_28] : memref<1x1xf32, #tpu.memory_space<vmem>>, vector<1x1xf32>
      %c0_29 = arith.constant 0 : index
      %c0_30 = arith.constant 0 : index
      %47 = vector.load %arg14[%c0_29, %c0_30] : memref<32x256xf32, #tpu.memory_space<vmem>>, vector<32x256xf32>
      %48 = vector.broadcast %45 : vector<1x256xf32> to vector<32x256xf32>
      %49 = arith.mulf %47, %48 : vector<32x256xf32>
      %50 = vector.broadcast %46 : vector<1x1xf32> to vector<32x256xf32>
      %51 = arith.mulf %50, %49 : vector<32x256xf32>
      %c0_31 = arith.constant 0 : index
      %c0_32 = arith.constant 0 : index
      %c0_33 = arith.constant 0 : index
      %52 = vector.load %arg3[%c0_31, %c0_32, %c0_33] : memref<1x32x256xf32, #tpu.memory_space<vmem>>, vector<1x32x256xf32>
      %53 = vector.shape_cast %52 : vector<1x32x256xf32> to vector<32x256xf32>
      %54 = arith.addf %51, %53 : vector<32x256xf32>
      %c0_34 = arith.constant 0 : index
      %c0_35 = arith.constant 0 : index
      %c0_36 = arith.constant 0 : index
      %55 = vector.load %arg10[%c0_34, %c0_35, %c0_36] : memref<1x32x256xf32, #tpu.memory_space<vmem>>, vector<1x32x256xf32>
      %56 = vector.shape_cast %55 : vector<1x32x256xf32> to vector<32x256xf32>
      %57 = vector.shape_cast %54 : vector<32x256xf32> to vector<1x32x256xf32>
      tpu.vector_store %arg10[%c0_34, %c0_35, %c0_36], %57 {strides = array<i32>} : memref<1x32x256xf32, #tpu.memory_space<vmem>>, vector<1x32x256xf32>,
    } else {
    }
    return
  }
  func.func @transform_0(%arg0: i32, %arg1: i32, %arg2: i32) -> (i32, i32, i32) {
    %c0_i32 = arith.constant 0 : i32
    %c0_i32_0 = arith.constant 0 : i32
    return %arg0, %c0_i32, %arg1 : i32, i32, i32
  }
  func.func @transform_1(%arg0: i32, %arg1: i32, %arg2: i32) -> (i32, i32, i32) {
    %c0_i32 = arith.constant 0 : i32
    %c0_i32_0 = arith.constant 0 : i32
    return %arg0, %c0_i32, %arg2 : i32, i32, i32
  }
  func.func @transform_2(%arg0: i32, %arg1: i32, %arg2: i32) -> (i32, i32) {
    %c0_i32 = arith.constant 0 : i32
    %c0_i32_0 = arith.constant 0 : i32
    %c0_i32_1 = arith.constant 0 : i32
    return %c0_i32, %c0_i32_0 : i32, i32
  }
  func.func @transform_3(%arg0: i32, %arg1: i32, %arg2: i32) -> (i32, i32) {
    %c0_i32 = arith.constant 0 : i32
    %c0_i32_0 = arith.constant 0 : i32
    %c0_i32_1 = arith.constant 0 : i32
    return %c0_i32, %c0_i32_0 : i32, i32
  }
  func.func @transform_4(%arg0: i32, %arg1: i32, %arg2: i32) -> (i32, i32) {
    %c0_i32 = arith.constant 0 : i32
    %c0_i32_0 = arith.constant 0 : i32
    %c0_i32_1 = arith.constant 0 : i32
    return %c0_i32, %c0_i32_0 : i32, i32
  }
  func.func @transform_5(%arg0: i32, %arg1: i32, %arg2: i32) -> (i32, i32) {
    %c0_i32 = arith.constant 0 : i32
    %c0_i32_0 = arith.constant 0 : i32
    %c0_i32_1 = arith.constant 0 : i32
    return %c0_i32, %c0_i32_0 : i32, i32
  }
  func.func @transform_6(%arg0: i32, %arg1: i32, %arg2: i32) -> (i32, i32) {
    %c0_i32 = arith.constant 0 : i32
    %c0_i32_0 = arith.constant 0 : i32
    %c0_i32_1 = arith.constant 0 : i32
    return %c0_i32, %c0_i32_0 : i32, i32
  }
  func.func @transform_7(%arg0: i32, %arg1: i32, %arg2: i32) -> (i32, i32, i32) {
    %c0_i32 = arith.constant 0 : i32
    %c0_i32_0 = arith.constant 0 : i32
    return %arg0, %c0_i32, %arg1 : i32, i32, i32
  }
}

</mosaic_0001>

<llo_original>
// kernel: tpu_custom_call.1
$region0: #{tpu_custom_call.1}
  #allocation0 [shape = 'u32[]', space=smem, size = 0x4, offset = 0x4, fixed_abs, tag = 'smem constant byte address 0x4 - core index']
  #allocation1 [shape = 'u32[144,128]{1,0:T(1,128)}', space=vmem, size = 0x12000, scoped, tag = 'internal scratch']
  #allocation2 [shape = 'f32[8,256]{1,0:T(8,128)}', space=vmem, size = 0x2000, scoped, tag = 'scratch operand']
  #allocation3 [shape = 'f32[1,256]{1,0:T(1,128)}', space=vmem, size = 0x400, scoped, tag = 'scratch operand']
  #allocation4 [shape = 'f32[1,256]{1,0:T(1,128)}', space=vmem, size = 0x400, scoped, tag = 'scratch operand']
  #allocation5 [shape = 'f32[32,256]{1,0:T(8,128)}', space=vmem, size = 0x8000, scoped, tag = 'scratch operand']
  #allocation6 [shape = 'f32[2,40,512]{2,1,0:T(8,128)}', space=vmem, size = 0x28000, scoped, tag = 'scratch operand']
  #allocation7 [shape = 'f32[1,1]{1,0:T(1,128)S(1)}', space=vmem, size = 0x200, scoped, tag = 'scoped memory for tpu_custom_call.1']
  %s0 = inlined_call_operand.hbm [shape: f32[2,32,1024], index: 0, kind: input, shape index: {}]
  %s1 = inlined_call_operand.hbm [shape: f32[2,32,1024], index: 1, kind: input, shape index: {}]
  %s2 = inlined_call_operand.vmem [shape: f32[8,32], index: 2, kind: input, shape index: {}]
  %s3 = inlined_call_operand.vmem [shape: f32[40,32], index: 3, kind: input, shape index: {}]
  %s4 = inlined_call_operand.vmem [shape: f32[8,1], index: 4, kind: input, shape index: {}]
  %s5 = inlined_call_operand.vmem [shape: f32[40,1], index: 5, kind: input, shape index: {}]
  %s6 = inlined_call_operand.<no memory space> [shape: f32[1,1], index: 6, kind: input, shape index: {}]
  %s7 = inlined_call_operand.hbm [shape: f32[2,32,1024], index: 7, kind: output, shape index: {}]
  %s8 = sld [smem:[#allocation0]]
  $region81: #{tpu_custom_call.1} parent=0
    _
  %s10 = ssub.s32 1, %s8
  %s11 = scalar_select 0, %s10, %s8
  %v12 = vstv %s6
  %13 = vst [vmem:[#allocation7] sm:$0x1] %v12
  $region1: #{tpu_custom_call.1} parent=0
    #allocation8 [shape = 'u8[65536]{0}', space=vmem, size = 0x10000, scoped, tag = 'input window, operand 0']
    #allocation9 [shape = 's32[2]{0}', space=sflag, size = 0x8, scoped, tag = 'scoped memory for tpu_custom_call.1']
    #allocation10 [shape = 's32[2]{0}', space=sflag, size = 0x8, scoped, tag = 'scoped memory for tpu_custom_call.1']
    #allocation11 [shape = 'u8[131072]{0}', space=vmem, size = 0x20000, scoped, tag = 'input window, operand 1']
    #allocation12 [shape = 's32[2]{0}', space=sflag, size = 0x8, scoped, tag = 'scoped memory for tpu_custom_call.1']
    #allocation13 [shape = 'u8[65536]{0}', space=vmem, size = 0x10000, scoped, tag = 'output window, operand 0']
    %14 = vsyncpa [#allocation9], 0
    %s15 = scalar_lea.sflag [#allocation9], 1
    %16 = vsyncpa %s15, 0
    %17 = vsyncpa [#allocation12], 0
    %s18 = scalar_lea.sflag [#allocation12], 1
    %19 = vsyncpa %s18, 0
    %20 = vsyncpa [#allocation10], 0
    %s21 = scalar_lea.sflag [#allocation10], 1
    %22 = vsyncpa %s21, 0
    loop: start=0, step=1, limit=18
    $region2: #{tpu_custom_call.1} parent=1 // loop_pre_header
      _
    $region3: #{tpu_custom_call.1} parent=1 // loop_header
      %s24 = sphi 0, %s28
      %p25 = scmp.ge.s32.totalorder %s24, 18
      %s31 = sphi 0, %s50
      %s32 = sphi 0, %s46
      %s33 = sphi 0, %s42
      %s34 = sphi 0, %s31
      %s35 = sphi 0, %s32
      %s36 = sphi 0, %s33
      %s37 = sphi 0, %s34
      %s38 = sphi 0, %s35
      %s39 = sphi 0, %s36
      %s55 = sphi 0, %s57
      %s58 = sphi 0, %s55
      %s59 = sphi 0, %s58
      %s75 = sphi 0, %s59
      %s83 = sphi 0, %s85
      %s86 = sphi 0, %s83
      %s87 = sphi 0, %s86
      %s103 = sphi 0, %s87
      %s107 = sphi 0, %s107
      %s109 = sphi 0, %s107
      %s110 = sphi 0, %s109
      %s124 = sphi 0, %s110
      %s128 = sphi 0, %s128
      %s130 = sphi 0, %s128
      %s131 = sphi 0, %s130
      %s145 = sphi 0, %s131
      %s149 = sphi 0, %s149
      %s151 = sphi 0, %s149
      %s152 = sphi 0, %s151
      %s166 = sphi 0, %s152
      %s170 = sphi 0, %s170
      %s172 = sphi 0, %s170
      %s173 = sphi 0, %s172
      %s187 = sphi 0, %s173
      %s191 = sphi 0, %s191
      %s193 = sphi 0, %s191
      %s194 = sphi 0, %s193
      %s208 = sphi 0, %s194
      %s216 = sphi 0, %s218
      %s219 = sphi 0, %s216
      %s220 = sphi 0, %s219
      %s236 = sphi 0, %s220
    $region4: #{tpu_custom_call.1} parent=1 // loop_header_branch
      %27 = sbr.rel (%p25) target = $region8
    $region5: #{tpu_custom_call.1} parent=1 // loop_body
      %s29 = ssub.s32 %s24, 1
      %s30 = ssub.s32 %s24, 2
      %s40 = sadd.s32 1, %s33
      %p41 = scmp.ge.s32.totalorder %s40, 2
      %s42 = scalar_select %p41, 0, %s40
      %s43 = sadd.s32 1, %s32
      %s44 = scalar_select %p41, %s43, %s32
      %p45 = scmp.ge.s32.totalorder %s44, 4
      %s46 = scalar_select %p45, 0, %s44
      %s47 = sadd.s32 1, %s31
      %s48 = scalar_select %p45, %s47, %s31
      %p49 = scmp.ge.s32.totalorder %s48, 2
      %s50 = scalar_select %p49, 0, %s48
      %s51 = ssub.s32 %s31, %s50
      %s52 = ssub.s32 %s32, %s46
      %s53 = sor.u32 %s51, %s52
      %p54 = scmp.eq.s32.totalorder %s53, 0
      %s56 = sadd.s32 %s55, 1
      %s57 = scalar_select %p54, %s55, %s56
      %p60 = pneg %p54
      %p61 = scmp.eq.s32.totalorder %s24, 15
      %p62 = por %p60, %p61
      %p63 = scmp.ne.s32.totalorder %s55, %s58
      %p64 = scmp.eq.s32.totalorder %s24, 0
      %p65 = por %p63, %p64
      %p66 = scmp.ne.s32.totalorder %s55, %s58
      %p67 = scmp.eq.s32.totalorder %s29, 15
      %p68 = por %p66, %p67
      %p69 = scmp.ne.s32.totalorder %s58, %s59
      %p70 = scmp.eq.s32.totalorder %s29, 0
      %p71 = por %p69, %p70
      %p72 = scmp.ne.s32.totalorder %s58, %s59
      %p73 = scmp.eq.s32.totalorder %s30, 15
      %p74 = por %p72, %p73
      %p76 = scmp.ne.s32.totalorder %s59, %s75
      %p77 = scmp.eq.s32.totalorder %s30, 0
      %p78 = por %p76, %p77
      %s79 = ssub.s32 %s31, %s50
      %s80 = ssub.s32 %s33, %s42
      %s81 = sor.u32 %s79, %s80
      %p82 = scmp.eq.s32.totalorder %s81, 0
      %s84 = sadd.s32 %s83, 1
      %s85 = scalar_select %p82, %s83, %s84
      %p88 = pneg %p82
      %p89 = scmp.eq.s32.totalorder %s24, 15
      %p90 = por %p88, %p89
      %p91 = scmp.ne.s32.totalorder %s83, %s86
      %p92 = scmp.eq.s32.totalorder %s24, 0
      %p93 = por %p91, %p92
      %p94 = scmp.ne.s32.totalorder %s83, %s86
      %p95 = scmp.eq.s32.totalorder %s29, 15
      %p96 = por %p94, %p95
      %p97 = scmp.ne.s32.totalorder %s86, %s87
      %p98 = scmp.eq.s32.totalorder %s29, 0
      %p99 = por %p97, %p98
      %p100 = scmp.ne.s32.totalorder %s86, %s87
      %p101 = scmp.eq.s32.totalorder %s30, 15
      %p102 = por %p100, %p101
      %p104 = scmp.ne.s32.totalorder %s87, %s103
      %p105 = scmp.eq.s32.totalorder %s30, 0
      %p106 = por %p104, %p105
      %s108 = sadd.s32 %s107, 1
      %p111 = scmp.eq.s32.totalorder %s24, 15
      %p112 = scmp.ne.s32.totalorder %s107, %s109
      %p113 = scmp.eq.s32.totalorder %s24, 0
      %p114 = por %p112, %p113
      %p115 = scmp.ne.s32.totalorder %s107, %s109
      %p116 = scmp.eq.s32.totalorder %s29, 15
      %p117 = por %p115, %p116
      %p118 = scmp.ne.s32.totalorder %s109, %s110
      %p119 = scmp.eq.s32.totalorder %s29, 0
      %p120 = por %p118, %p119
      %p121 = scmp.ne.s32.totalorder %s109, %s110
      %p122 = scmp.eq.s32.totalorder %s30, 15
      %p123 = por %p121, %p122
      %p125 = scmp.ne.s32.totalorder %s110, %s124
      %p126 = scmp.eq.s32.totalorder %s30, 0
      %p127 = por %p125, %p126
      %s129 = sadd.s32 %s128, 1
      %p132 = scmp.eq.s32.totalorder %s24, 15
      %p133 = scmp.ne.s32.totalorder %s128, %s130
      %p134 = scmp.eq.s32.totalorder %s24, 0
      %p135 = por %p133, %p134
      %p136 = scmp.ne.s32.totalorder %s128, %s130
      %p137 = scmp.eq.s32.totalorder %s29, 15
      %p138 = por %p136, %p137
      %p139 = scmp.ne.s32.totalorder %s130, %s131
      %p140 = scmp.eq.s32.totalorder %s29, 0
      %p141 = por %p139, %p140
      %p142 = scmp.ne.s32.totalorder %s130, %s131
      %p143 = scmp.eq.s32.totalorder %s30, 15
      %p144 = por %p142, %p143
      %p146 = scmp.ne.s32.totalorder %s131, %s145
      %p147 = scmp.eq.s32.totalorder %s30, 0
      %p148 = por %p146, %p147
      %s150 = sadd.s32 %s149, 1
      %p153 = scmp.eq.s32.totalorder %s24, 15
      %p154 = scmp.ne.s32.totalorder %s149, %s151
      %p155 = scmp.eq.s32.totalorder %s24, 0
      %p156 = por %p154, %p155
      %p157 = scmp.ne.s32.totalorder %s149, %s151
      %p158 = scmp.eq.s32.totalorder %s29, 15
      %p159 = por %p157, %p158
      %p160 = scmp.ne.s32.totalorder %s151, %s152
      %p161 = scmp.eq.s32.totalorder %s29, 0
      %p162 = por %p160, %p161
      %p163 = scmp.ne.s32.totalorder %s151, %s152
      %p164 = scmp.eq.s32.totalorder %s30, 15
      %p165 = por %p163, %p164
      %p167 = scmp.ne.s32.totalorder %s152, %s166
      %p168 = scmp.eq.s32.totalorder %s30, 0
      %p169 = por %p167, %p168
      %s171 = sadd.s32 %s170, 1
      %p174 = scmp.eq.s32.totalorder %s24, 15
      %p175 = scmp.ne.s32.totalorder %s170, %s172
      %p176 = scmp.eq.s32.totalorder %s24, 0
      %p177 = por %p175, %p176
      %p178 = scmp.ne.s32.totalorder %s170, %s172
      %p179 = scmp.eq.s32.totalorder %s29, 15
      %p180 = por %p178, %p179
      %p181 = scmp.ne.s32.totalorder %s172, %s173
      %p182 = scmp.eq.s32.totalorder %s29, 0
      %p183 = por %p181, %p182
      %p184 = scmp.ne.s32.totalorder %s172, %s173
      %p185 = scmp.eq.s32.totalorder %s30, 15
      %p186 = por %p184, %p185
      %p188 = scmp.ne.s32.totalorder %s173, %s187
      %p189 = scmp.eq.s32.totalorder %s30, 0
      %p190 = por %p188, %p189
      %s192 = sadd.s32 %s191, 1
      %p195 = scmp.eq.s32.totalorder %s24, 15
      %p196 = scmp.ne.s32.totalorder %s191, %s193
      %p197 = scmp.eq.s32.totalorder %s24, 0
      %p198 = por %p196, %p197
      %p199 = scmp.ne.s32.totalorder %s191, %s193
      %p200 = scmp.eq.s32.totalorder %s29, 15
      %p201 = por %p199, %p200
      %p202 = scmp.ne.s32.totalorder %s193, %s194
      %p203 = scmp.eq.s32.totalorder %s29, 0
      %p204 = por %p202, %p203
      %p205 = scmp.ne.s32.totalorder %s193, %s194
      %p206 = scmp.eq.s32.totalorder %s30, 15
      %p207 = por %p205, %p206
      %p209 = scmp.ne.s32.totalorder %s194, %s208
      %p210 = scmp.eq.s32.totalorder %s30, 0
      %p211 = por %p209, %p210
      %s212 = ssub.s32 %s31, %s50
      %s213 = ssub.s32 %s32, %s46
      %s214 = sor.u32 %s212, %s213
      %p215 = scmp.eq.s32.totalorder %s214, 0
      %s217 = sadd.s32 %s216, 1
      %s218 = scalar_select %p215, %s216, %s217
      %p221 = pneg %p215
      %p222 = scmp.eq.s32.totalorder %s24, 15
      %p223 = por %p221, %p222
      %p224 = scmp.ne.s32.totalorder %s216, %s219
      %p225 = scmp.eq.s32.totalorder %s24, 0
      %p226 = por %p224, %p225
      %p227 = scmp.ne.s32.totalorder %s216, %s219
      %p228 = scmp.eq.s32.totalorder %s29, 15
      %p229 = por %p227, %p228
      %p230 = scmp.ne.s32.totalorder %s219, %s220
      %p231 = scmp.eq.s32.totalorder %s29, 0
      %p232 = por %p230, %p231
      %p233 = scmp.ne.s32.totalorder %s219, %s220
      %p234 = scmp.eq.s32.totalorder %s30, 15
      %p235 = por %p233, %p234
      %p237 = scmp.ne.s32.totalorder %s220, %s236
      %p238 = scmp.eq.s32.totalorder %s30, 0
      %p239 = por %p237, %p238
      %p240 = scmp.le.s32.totalorder 1, %s24
      %p241 = scmp.lt.s32.totalorder %s24, 17
      %p242 = pnand %p240, %p241
      %p243 = pneg %p242
      // Predicated region
      $region9: #{tpu_custom_call.1} parent=5 // pred_check
        _
      $region10: #{tpu_custom_call.1} parent=5 // pred_check_branch
        %245 = sbr.rel (%p242) target = $region12
      $region11: #{tpu_custom_call.1} parent=5 // pred_region
        %s246 = ssub.s32 %s24, 1
        // Predicated region
        $region13: #{tpu_custom_call.1} parent=11 // pred_check
          %p247 = pneg %p120
        $region14: #{tpu_custom_call.1} parent=11 // pred_check_branch
          %249 = sbr.rel (%p247) target = $region16
        $region15: #{tpu_custom_call.1} parent=11 // pred_region
          _
        $region16: #{tpu_custom_call.1} parent=11 // pred_fallthru
          _
        // Predicated region
        $region17: #{tpu_custom_call.1} parent=11 // pred_check
          %p250 = pneg %p141
        $region18: #{tpu_custom_call.1} parent=11 // pred_check_branch
          %252 = sbr.rel (%p250) target = $region20
        $region19: #{tpu_custom_call.1} parent=11 // pred_region
          _
        $region20: #{tpu_custom_call.1} parent=11 // pred_fallthru
          _
        // Predicated region
        $region21: #{tpu_custom_call.1} parent=11 // pred_check
          %p253 = pneg %p162
        $region22: #{tpu_custom_call.1} parent=11 // pred_check_branch
          %255 = sbr.rel (%p253) target = $region24
        $region23: #{tpu_custom_call.1} parent=11 // pred_region
          _
        $region24: #{tpu_custom_call.1} parent=11 // pred_fallthru
          _
        // Predicated region
        $region25: #{tpu_custom_call.1} parent=11 // pred_check
          %p256 = pneg %p183
        $region26: #{tpu_custom_call.1} parent=11 // pred_check_branch
          %258 = sbr.rel (%p256) target = $region28
        $region27: #{tpu_custom_call.1} parent=11 // pred_region
          _
        $region28: #{tpu_custom_call.1} parent=11 // pred_fallthru
          _
        // Predicated region
        $region29: #{tpu_custom_call.1} parent=11 // pred_check
          %p259 = pneg %p204
        $region30: #{tpu_custom_call.1} parent=11 // pred_check_branch
          %261 = sbr.rel (%p259) target = $region32
        $region31: #{tpu_custom_call.1} parent=11 // pred_region
          _
        $region32: #{tpu_custom_call.1} parent=11 // pred_fallthru
          _
      $region12: #{tpu_custom_call.1} parent=5 // pred_fallthru
        _
      %p262 = scmp.lt.s32.totalorder %s24, 16
      // Predicated region
      $region33: #{tpu_custom_call.1} parent=5 // pred_check
        %p263 = pneg %p262
      $region34: #{tpu_custom_call.1} parent=5 // pred_check_branch
        %265 = sbr.rel (%p263) target = $region36
      $region35: #{tpu_custom_call.1} parent=5 // pred_region
        // Predicated region
        $region37: #{tpu_custom_call.1} parent=35 // pred_check
          %p266 = pneg %p65
        $region38: #{tpu_custom_call.1} parent=35 // pred_check_branch
          %268 = sbr.rel (%p266) target = $region40
        $region39: #{tpu_custom_call.1} parent=35 // pred_region
          %s269 = sand.u32 %s55, 1
          %s270 = scalar_lea.sflag [#allocation9], %s269
          %s271 = sand.u32 %s55, 1
          %s272 = smul.addr %s271, 64
          %s273 = scalar_lea.vmem [#allocation8], %s272
          %s274 = smul.u32 2, %s32
          %s276 = ssub.s32 1024, 1024
          %277 = vsyncadd %s270, %s276
          %s278 = smul.addr %s31, 32
          %s279 = sadd.s32 %s274, %s278
          %s280 = smul.addr %s279, 128
          %s281 = scalar_lea.hbm %s0, %s280
          %s282 = sshll.u32 %s273, 4
          %s283 = int_to_ptr.vmem [resolvable:$true] %s282
          %288 = dma.hbm_to_vmem [thread:$0]  %s281, 1024, %s283, %s270, 1024, 256, 16
        $region40: #{tpu_custom_call.1} parent=35 // pred_fallthru
          _
        // Predicated region
        $region41: #{tpu_custom_call.1} parent=35 // pred_check
          %p289 = pneg %p93
        $region42: #{tpu_custom_call.1} parent=35 // pred_check_branch
          %291 = sbr.rel (%p289) target = $region44
        $region43: #{tpu_custom_call.1} parent=35 // pred_region
          %s292 = sand.u32 %s83, 1
          %s293 = scalar_lea.sflag [#allocation12], %s292
          %s294 = sand.u32 %s83, 1
          %s295 = smul.addr %s294, 128
          %s296 = scalar_lea.vmem [#allocation11], %s295
          %s297 = smul.u32 4, %s33
          %s299 = ssub.s32 2048, 2048
          %300 = vsyncadd %s293, %s299
          %s301 = smul.addr %s31, 32
          %s302 = sadd.s32 %s297, %s301
          %s303 = smul.addr %s302, 128
          %s304 = scalar_lea.hbm %s1, %s303
          %s305 = sshll.u32 %s296, 4
          %s306 = int_to_ptr.vmem [resolvable:$true] %s305
          %311 = dma.hbm_to_vmem [thread:$0]  %s304, 2048, %s306, %s293, 1024, 512, 32
        $region44: #{tpu_custom_call.1} parent=35 // pred_fallthru
          _
      $region36: #{tpu_custom_call.1} parent=5 // pred_fallthru
        _
      %p312 = scmp.le.s32.totalorder 1, %s24
      %p313 = scmp.lt.s32.totalorder %s24, 17
      %p314 = pnand %p312, %p313
      %p315 = pneg %p314
      // Predicated region
      $region45: #{tpu_custom_call.1} parent=5 // pred_check
        _
      $region46: #{tpu_custom_call.1} parent=5 // pred_check_branch
        %317 = sbr.rel (%p314) target = $region48
      $region47: #{tpu_custom_call.1} parent=5 // pred_region
        %s318 = ssub.s32 %s24, 1
        %s319 = sand.u32 %s58, 1
        %s320 = scalar_lea.sflag [#allocation9], %s319
        %s321 = sand.u32 %s58, 1
        %s322 = smul.addr %s321, 64
        %s323 = scalar_lea.vmem [#allocation8], %s322
        // Predicated region
        $region49: #{tpu_custom_call.1} parent=47 // pred_check
          %p324 = pneg %p71
        $region50: #{tpu_custom_call.1} parent=47 // pred_check_branch
          %326 = sbr.rel (%p324) target = $region52
        $region51: #{tpu_custom_call.1} parent=47 // pred_region
          %327 = dma.done %s320, 1024
        $region52: #{tpu_custom_call.1} parent=47 // pred_fallthru
          _
        %s328 = sand.u32 %s86, 1
        %s329 = scalar_lea.sflag [#allocation12], %s328
        %s330 = sand.u32 %s86, 1
        %s331 = smul.addr %s330, 128
        %s332 = scalar_lea.vmem [#allocation11], %s331
        // Predicated region
        $region53: #{tpu_custom_call.1} parent=47 // pred_check
          %p333 = pneg %p99
        $region54: #{tpu_custom_call.1} parent=47 // pred_check_branch
          %335 = sbr.rel (%p333) target = $region56
        $region55: #{tpu_custom_call.1} parent=47 // pred_region
          %336 = dma.done %s329, 2048
        $region56: #{tpu_custom_call.1} parent=47 // pred_fallthru
          _
        %s337 = sand.u32 %s58, 1
        %s338 = scalar_lea.sflag [#allocation9], %s337
        %s339 = sand.u32 %s58, 1
        %s340 = smul.addr %s339, 64
        %s341 = scalar_lea.vmem [#allocation8], %s340
        %p342 = pneg %p71
        %p343 = pneg %p68
        %s344 = sand.u32 %s86, 1
        %s345 = scalar_lea.sflag [#allocation12], %s344
        %s346 = sand.u32 %s86, 1
        %s347 = smul.addr %s346, 128
        %s348 = scalar_lea.vmem [#allocation11], %s347
        %p349 = pneg %p99
        %p350 = pneg %p96
        %p351 = pneg %p120
        %p352 = pneg %p117
        %p353 = pneg %p141
        %p354 = pneg %p138
        %p355 = pneg %p162
        %p356 = pneg %p159
        %p357 = pneg %p183
        %p358 = pneg %p180
        %p359 = pneg %p204
        %p360 = pneg %p201
        %p361 = pneg %p232
        %p362 = pneg %p229
        %s363 = sand.u32 %s219, 1
        %s364 = scalar_lea.sflag [#allocation10], %s363
        %s365 = sand.u32 %s219, 1
        %s366 = smul.addr %s365, 64
        %s367 = scalar_lea.vmem [#allocation13], %s366
        %s368 = smul.u32 2, %s35
        %s369 = smul.u32 4, %s36
        %s370 = smul.u32 2, %s35
        %p371 = scmp.eq.s32.totalorder %s36, 0
        // Predicated region
        $region57: #{tpu_custom_call.1} parent=47 // pred_check
          %p372 = pneg %p371
        $region58: #{tpu_custom_call.1} parent=47 // pred_check_branch
          %374 = sbr.rel (%p372) target = $region60
        $region59: #{tpu_custom_call.1} parent=47 // pred_region
          %v375 = vld [vmem:[%s2] sm:$0xff]
          %v376 = vld [vmem:[%s323] sm:$0xff]
          %v377 = vld [vmem:[%s323 + $0x8] sm:$0xff]
          %v378 = vld [vmem:[%s323 + $0x10] sm:$0xff]
          %v379 = vld [vmem:[%s323 + $0x18] sm:$0xff]
          %v380 = vld [vmem:[%s323 + $0x20] sm:$0xff]
          %v381 = vld [vmem:[%s323 + $0x28] sm:$0xff]
          %v382 = vld [vmem:[%s323 + $0x30] sm:$0xff]
          %v383 = vld [vmem:[%s323 + $0x38] sm:$0xff]
          %v384 = vld [vmem:[%s4] sm:$0xff]
          %386 = vset.pattern.permute.xlu0 0
          %387 = vperm.xlu0 %386, %v384
          %v388 = vpop.permute.xlu0 %387
          %vm390 = vcmask 261120
          %v392 = vsel %vm390, %v375, 0
          %394 = vmatprep.subr.mxu0 0.0
          %395 = vmatpush1.msra.mxu0 0.0
          %396 = vmatprep.subr.mxu0 0.0
          %397 = vmatpush1.msra.mxu0 0.0
          %398 = vmatprep.subr.mxu0 0.0
          %399 = vmatpush1.msra.mxu0 0.0
          %400 = vmatprep.subr.mxu0 0.0
          %401 = vmatpush1.msra.mxu0 0.0
          %402 = vmatprep.subr.mxu0 0.0
          %403 = vmatpush1.msra.mxu0 0.0
          %404 = vmatprep.subr.mxu0 0.0
          %405 = vmatpush1.msra.mxu0 0.0
          %406 = vmatprep.subr.mxu0 0.0
          %407 = vmatpush1.msra.mxu0 0.0
          %408 = vmatprep.subr.mxu0 0.0
          %409 = vmatpush1.msra.mxu0 0.0
          %410 = vmatprep.subr.mxu0 0.0
          %411 = vmatpush1.msra.mxu0 0.0
          %412 = vmatprep.subr.mxu0 0.0
          %413 = vmatpush1.msra.mxu0 0.0
          %414 = vmatprep.subr.mxu0 0.0
          %415 = vmatpush1.msra.mxu0 0.0
          %416 = vmatprep.subr.mxu0 0.0
          %417 = vmatpush1.msra.mxu0 0.0
          %418 = vmatprep.subr.mxu0 %v383
          %419 = vmatpush1.msra.mxu0 %v382
          %420 = vmatprep.subr.mxu0 %v381
          %421 = vmatpush1.msra.mxu0 %v380
          %422 = vmatprep.subr.mxu0 %v379
          %423 = vmatpush1.msra.mxu0 %v378
          %424 = vmatprep.subr.mxu0 %v377
          %425 = vmatpush1.msra.mxu0 %v376
          %426 = vmatprep.subr.mxu0 0.0
          %427 = vmatpush2.msra.mxu0 0.0
          %428 = vmatprep.subr.mxu0 0.0
          %429 = vmatpush2.msra.mxu0 0.0
          %430 = vmatprep.subr.mxu0 0.0
          %431 = vmatpush2.msra.mxu0 0.0
          %432 = vmatprep.subr.mxu0 0.0
          %433 = vmatpush2.msra.mxu0 0.0
          %434 = vmatprep.subr.mxu0 0.0
          %435 = vmatpush2.msra.mxu0 0.0
          %436 = vmatprep.subr.mxu0 0.0
          %437 = vmatpush2.msra.mxu0 0.0
          %438 = vmatprep.subr.mxu0 0.0
          %439 = vmatpush2.msra.mxu0 0.0
          %440 = vmatprep.subr.mxu0 0.0
          %441 = vmatpush2.msra.mxu0 0.0
          %442 = vmatprep.subr.mxu0 0.0
          %443 = vmatpush2.msra.mxu0 0.0
          %444 = vmatprep.subr.mxu0 0.0
          %445 = vmatpush2.msra.mxu0 0.0
          %446 = vmatprep.subr.mxu0 0.0
          %447 = vmatpush2.msra.mxu0 0.0
          %448 = vmatprep.subr.mxu0 0.0
          %449 = vmatpush2.msra.mxu0 0.0
          %450 = vmatprep.subr.mxu0 0.0
          %451 = vmatpush2.msra.mxu0 0.0
          %452 = vmatprep.subr.mxu0 0.0
          %453 = vmatpush2.msra.mxu0 0.0
          %454 = vmatprep.subr.mxu0 0.0
          %455 = vmatpush2.msra.mxu0 0.0
          %456 = vmatprep.subr.mxu0 0.0
          %457 = vmatpush2.msra.mxu0 0.0
          %458 = vmatprep.mubr.f32.mxu0 0.0
          %459 = vmatmul.mubr.f32.gmra.mxu0 %v392
          %v460 = vpop.f32.mrf.mxu0
          %v461 = vadd.f32 %v388, %v460
          %v462 = vpop.f32.mrf.mxu0
          %v463 = vadd.f32 %v388, %v462
          %464 = vdwg.mxu0
          %465 = vst [vmem:[#allocation2] sm:$0xff] %v461
          %466 = vst [vmem:[#allocation2 + $0x8] sm:$0xff] %v463
          %v467 = vlaneseq
          %vm468 = vcmp.ge.s32.totalorder %v467, 0
          %vm469 = vcmp.lt.s32.totalorder %v467, 256
          %vm470 = vmand %vm468, %vm469
          %471 = vst.msk [vmem:[#allocation3] sm:$0x3] %vm470, -inf
          %472 = vst.msk [vmem:[#allocation4] sm:$0x3] %vm470, 0.0
          %473 = vst [vmem:[#allocation5] sm:$0xff] 0.0
          %474 = vst [vmem:[#allocation5 + $0x8] sm:$0xff] 0.0
          %475 = vst [vmem:[#allocation5 + $0x10] sm:$0xff] 0.0
          %476 = vst [vmem:[#allocation5 + $0x18] sm:$0xff] 0.0
          %477 = vst [vmem:[#allocation5 + $0x20] sm:$0xff] 0.0
          %478 = vst [vmem:[#allocation5 + $0x28] sm:$0xff] 0.0
          %479 = vst [vmem:[#allocation5 + $0x30] sm:$0xff] 0.0
          %480 = vst [vmem:[#allocation5 + $0x38] sm:$0xff] 0.0
        $region60: #{tpu_custom_call.1} parent=47 // pred_fallthru
          _
        %p481 = scmp.eq.s32.totalorder %s35, 0
        // Predicated region
        $region61: #{tpu_custom_call.1} parent=47 // pred_check
          %p482 = pneg %p481
        $region62: #{tpu_custom_call.1} parent=47 // pred_check_branch
          %484 = sbr.rel (%p482) target = $region64
        $region63: #{tpu_custom_call.1} parent=47 // pred_region
          %v485 = vld [vmem:[%s3] sm:$0xff]
          %v486 = vld [vmem:[%s3 + $0x8] sm:$0xff]
          %v487 = vld [vmem:[%s3 + $0x10] sm:$0xff]
          %v488 = vld [vmem:[%s3 + $0x18] sm:$0xff]
          %v489 = vld [vmem:[%s3 + $0x20] sm:$0xff]
          %v490 = vld [vmem:[%s332] sm:$0xff]
          %v491 = vld [vmem:[%s332 + $0x8] sm:$0xff]
          %v492 = vld [vmem:[%s332 + $0x10] sm:$0xff]
          %v493 = vld [vmem:[%s332 + $0x18] sm:$0xff]
          %v494 = vld [vmem:[%s332 + $0x20] sm:$0xff]
          %v495 = vld [vmem:[%s332 + $0x28] sm:$0xff]
          %v496 = vld [vmem:[%s332 + $0x30] sm:$0xff]
          %v497 = vld [vmem:[%s332 + $0x38] sm:$0xff]
          %v498 = vld [vmem:[%s332 + $0x40] sm:$0xff]
          %v499 = vld [vmem:[%s332 + $0x48] sm:$0xff]
          %v500 = vld [vmem:[%s332 + $0x50] sm:$0xff]
          %v501 = vld [vmem:[%s332 + $0x58] sm:$0xff]
          %v502 = vld [vmem:[%s332 + $0x60] sm:$0xff]
          %v503 = vld [vmem:[%s332 + $0x68] sm:$0xff]
          %v504 = vld [vmem:[%s332 + $0x70] sm:$0xff]
          %v505 = vld [vmem:[%s332 + $0x78] sm:$0xff]
          %v506 = vld [vmem:[%s5] sm:$0xff]
          %v507 = vld [vmem:[%s5 + $0x8] sm:$0xff]
          %v508 = vld [vmem:[%s5 + $0x10] sm:$0xff]
          %v509 = vld [vmem:[%s5 + $0x18] sm:$0xff]
          %v510 = vld [vmem:[%s5 + $0x20] sm:$0xff]
          %512 = vset.pattern.permute.xlu0 0
          %513 = vperm.xlu0 %512, %v506
          %v514 = vpop.permute.xlu0 %513
          %517 = vset.pattern.permute.xlu0 0
          %518 = vperm.xlu0 %517, %v507
          %v519 = vpop.permute.xlu0 %518
          %522 = vset.pattern.permute.xlu0 0
          %523 = vperm.xlu0 %522, %v508
          %v524 = vpop.permute.xlu0 %523
          %527 = vset.pattern.permute.xlu0 0
          %528 = vperm.xlu0 %527, %v509
          %v529 = vpop.permute.xlu0 %528
          %532 = vset.pattern.permute.xlu0 0
          %533 = vperm.xlu0 %532, %v510
          %v534 = vpop.permute.xlu0 %533
          %vm536 = vcmask 261120
          %v538 = vsel %vm536, %v485, 0
          %v541 = vsel %vm536, %v486, 0
          %v544 = vsel %vm536, %v487, 0
          %v547 = vsel %vm536, %v488, 0
          %v550 = vsel %vm536, %v489, 0
          %552 = vmatprep.subr.mxu0 0.0
          %553 = vmatpush1.msra.mxu0 0.0
          %554 = vmatprep.subr.mxu0 0.0
          %555 = vmatpush1.msra.mxu0 0.0
          %556 = vmatprep.subr.mxu0 0.0
          %557 = vmatpush1.msra.mxu0 0.0
          %558 = vmatprep.subr.mxu0 0.0
          %559 = vmatpush1.msra.mxu0 0.0
          %560 = vmatprep.subr.mxu0 0.0
          %561 = vmatpush1.msra.mxu0 0.0
          %562 = vmatprep.subr.mxu0 0.0
          %563 = vmatpush1.msra.mxu0 0.0
          %564 = vmatprep.subr.mxu0 0.0
          %565 = vmatpush1.msra.mxu0 0.0
          %566 = vmatprep.subr.mxu0 0.0
          %567 = vmatpush1.msra.mxu0 0.0
          %568 = vmatprep.subr.mxu0 0.0
          %569 = vmatpush1.msra.mxu0 0.0
          %570 = vmatprep.subr.mxu0 0.0
          %571 = vmatpush1.msra.mxu0 0.0
          %572 = vmatprep.subr.mxu0 0.0
          %573 = vmatpush1.msra.mxu0 0.0
          %574 = vmatprep.subr.mxu0 0.0
          %575 = vmatpush1.msra.mxu0 0.0
          %576 = vmatprep.subr.mxu0 %v503
          %577 = vmatpush1.msra.mxu0 %v502
          %578 = vmatprep.subr.mxu0 %v499
          %579 = vmatpush1.msra.mxu0 %v498
          %580 = vmatprep.subr.mxu0 %v495
          %581 = vmatpush1.msra.mxu0 %v494
          %582 = vmatprep.subr.mxu0 %v491
          %583 = vmatpush1.msra.mxu0 %v490
          %584 = vmatprep.subr.mxu0 0.0
          %585 = vmatpush2.msra.mxu0 0.0
          %586 = vmatprep.subr.mxu0 0.0
          %587 = vmatpush2.msra.mxu0 0.0
          %588 = vmatprep.subr.mxu0 0.0
          %589 = vmatpush2.msra.mxu0 0.0
          %590 = vmatprep.subr.mxu0 0.0
          %591 = vmatpush2.msra.mxu0 0.0
          %592 = vmatprep.subr.mxu0 0.0
          %593 = vmatpush2.msra.mxu0 0.0
          %594 = vmatprep.subr.mxu0 0.0
          %595 = vmatpush2.msra.mxu0 0.0
          %596 = vmatprep.subr.mxu0 0.0
          %597 = vmatpush2.msra.mxu0 0.0
          %598 = vmatprep.subr.mxu0 0.0
          %599 = vmatpush2.msra.mxu0 0.0
          %600 = vmatprep.subr.mxu0 0.0
          %601 = vmatpush2.msra.mxu0 0.0
          %602 = vmatprep.subr.mxu0 0.0
          %603 = vmatpush2.msra.mxu0 0.0
          %604 = vmatprep.subr.mxu0 0.0
          %605 = vmatpush2.msra.mxu0 0.0
          %606 = vmatprep.subr.mxu0 0.0
          %607 = vmatpush2.msra.mxu0 0.0
          %608 = vmatprep.subr.mxu0 0.0
          %609 = vmatpush2.msra.mxu0 0.0
          %610 = vmatprep.subr.mxu0 0.0
          %611 = vmatpush2.msra.mxu0 0.0
          %612 = vmatprep.subr.mxu0 0.0
          %613 = vmatpush2.msra.mxu0 0.0
          %614 = vmatprep.subr.mxu0 0.0
          %615 = vmatpush2.msra.mxu0 0.0
          %616 = vmatprep.mubr.f32.mxu0 0.0
          %617 = vmatmul.mubr.f32.gmra.mxu0 %v538
          %v618 = vpop.f32.mrf.mxu0
          %v619 = vadd.f32 %v514, %v618
          %v620 = vpop.f32.mrf.mxu0
          %v621 = vadd.f32 %v514, %v620
          %622 = vmatprep.mubr.f32.mxu0 0.0
          %623 = vmatmul.mubr.f32.gmra.mxu0 %v541
          %v624 = vpop.f32.mrf.mxu0
          %v625 = vadd.f32 %v519, %v624
          %v626 = vpop.f32.mrf.mxu0
          %v627 = vadd.f32 %v519, %v626
          %628 = vmatprep.mubr.f32.mxu0 0.0
          %629 = vmatmul.mubr.f32.gmra.mxu0 %v544
          %v630 = vpop.f32.mrf.mxu0
          %v631 = vadd.f32 %v524, %v630
          %v632 = vpop.f32.mrf.mxu0
          %v633 = vadd.f32 %v524, %v632
          %634 = vmatprep.mubr.f32.mxu0 0.0
          %635 = vmatmul.mubr.f32.gmra.mxu0 %v547
          %v636 = vpop.f32.mrf.mxu0
          %v637 = vadd.f32 %v529, %v636
          %v638 = vpop.f32.mrf.mxu0
          %v639 = vadd.f32 %v529, %v638
          %640 = vmatprep.mubr.f32.mxu0 0.0
          %641 = vmatmul.mubr.f32.gmra.mxu0 %v550
          %v642 = vpop.f32.mrf.mxu0
          %v643 = vadd.f32 %v534, %v642
          %v644 = vpop.f32.mrf.mxu0
          %v645 = vadd.f32 %v534, %v644
          %646 = vdwg.mxu0
          %647 = vmatprep.subr.mxu0 0.0
          %648 = vmatpush1.msra.mxu0 0.0
          %649 = vmatprep.subr.mxu0 0.0
          %650 = vmatpush1.msra.mxu0 0.0
          %651 = vmatprep.subr.mxu0 0.0
          %652 = vmatpush1.msra.mxu0 0.0
          %653 = vmatprep.subr.mxu0 0.0
          %654 = vmatpush1.msra.mxu0 0.0
          %655 = vmatprep.subr.mxu0 0.0
          %656 = vmatpush1.msra.mxu0 0.0
          %657 = vmatprep.subr.mxu0 0.0
          %658 = vmatpush1.msra.mxu0 0.0
          %659 = vmatprep.subr.mxu0 0.0
          %660 = vmatpush1.msra.mxu0 0.0
          %661 = vmatprep.subr.mxu0 0.0
          %662 = vmatpush1.msra.mxu0 0.0
          %663 = vmatprep.subr.mxu0 0.0
          %664 = vmatpush1.msra.mxu0 0.0
          %665 = vmatprep.subr.mxu0 0.0
          %666 = vmatpush1.msra.mxu0 0.0
          %667 = vmatprep.subr.mxu0 0.0
          %668 = vmatpush1.msra.mxu0 0.0
          %669 = vmatprep.subr.mxu0 0.0
          %670 = vmatpush1.msra.mxu0 0.0
          %671 = vmatprep.subr.mxu0 %v505
          %672 = vmatpush1.msra.mxu0 %v504
          %673 = vmatprep.subr.mxu0 %v501
          %674 = vmatpush1.msra.mxu0 %v500
          %675 = vmatprep.subr.mxu0 %v497
          %676 = vmatpush1.msra.mxu0 %v496
          %677 = vmatprep.subr.mxu0 %v493
          %678 = vmatpush1.msra.mxu0 %v492
          %679 = vmatprep.subr.mxu0 0.0
          %680 = vmatpush2.msra.mxu0 0.0
          %681 = vmatprep.subr.mxu0 0.0
          %682 = vmatpush2.msra.mxu0 0.0
          %683 = vmatprep.subr.mxu0 0.0
          %684 = vmatpush2.msra.mxu0 0.0
          %685 = vmatprep.subr.mxu0 0.0
          %686 = vmatpush2.msra.mxu0 0.0
          %687 = vmatprep.subr.mxu0 0.0
          %688 = vmatpush2.msra.mxu0 0.0
          %689 = vmatprep.subr.mxu0 0.0
          %690 = vmatpush2.msra.mxu0 0.0
          %691 = vmatprep.subr.mxu0 0.0
          %692 = vmatpush2.msra.mxu0 0.0
          %693 = vmatprep.subr.mxu0 0.0
          %694 = vmatpush2.msra.mxu0 0.0
          %695 = vmatprep.subr.mxu0 0.0
          %696 = vmatpush2.msra.mxu0 0.0
          %697 = vmatprep.subr.mxu0 0.0
          %698 = vmatpush2.msra.mxu0 0.0
          %699 = vmatprep.subr.mxu0 0.0
          %700 = vmatpush2.msra.mxu0 0.0
          %701 = vmatprep.subr.mxu0 0.0
          %702 = vmatpush2.msra.mxu0 0.0
          %703 = vmatprep.subr.mxu0 0.0
          %704 = vmatpush2.msra.mxu0 0.0
          %705 = vmatprep.subr.mxu0 0.0
          %706 = vmatpush2.msra.mxu0 0.0
          %707 = vmatprep.subr.mxu0 0.0
          %708 = vmatpush2.msra.mxu0 0.0
          %709 = vmatprep.subr.mxu0 0.0
          %710 = vmatpush2.msra.mxu0 0.0
          %711 = vmatprep.mubr.f32.mxu0 0.0
          %712 = vmatmul.mubr.f32.gmra.mxu0 %v538
          %v713 = vpop.f32.mrf.mxu0
          %v714 = vadd.f32 %v514, %v713
          %v715 = vpop.f32.mrf.mxu0
          %v716 = vadd.f32 %v514, %v715
          %717 = vmatprep.mubr.f32.mxu0 0.0
          %718 = vmatmul.mubr.f32.gmra.mxu0 %v541
          %v719 = vpop.f32.mrf.mxu0
          %v720 = vadd.f32 %v519, %v719
          %v721 = vpop.f32.mrf.mxu0
          %v722 = vadd.f32 %v519, %v721
          %723 = vmatprep.mubr.f32.mxu0 0.0
          %724 = vmatmul.mubr.f32.gmra.mxu0 %v544
          %v725 = vpop.f32.mrf.mxu0
          %v726 = vadd.f32 %v524, %v725
          %v727 = vpop.f32.mrf.mxu0
          %v728 = vadd.f32 %v524, %v727
          %729 = vmatprep.mubr.f32.mxu0 0.0
          %730 = vmatmul.mubr.f32.gmra.mxu0 %v547
          %v731 = vpop.f32.mrf.mxu0
          %v732 = vadd.f32 %v529, %v731
          %v733 = vpop.f32.mrf.mxu0
          %v734 = vadd.f32 %v529, %v733
          %735 = vmatprep.mubr.f32.mxu0 0.0
          %736 = vmatmul.mubr.f32.gmra.mxu0 %v550
          %v737 = vpop.f32.mrf.mxu0
          %v738 = vadd.f32 %v534, %v737
          %v739 = vpop.f32.mrf.mxu0
          %v740 = vadd.f32 %v534, %v739
          %741 = vdwg.mxu0
          %s742 = smul.u32 %s36, 20
          %s743 = smul.addr %s742, 8
          %s744 = scalar_lea.vmem [#allocation6], %s743
          %745 = vst [vmem:[%s744] sm:$0xff] %v619
          %746 = vst [vmem:[%s744 + $0x8] sm:$0xff] %v621
          %747 = vst [vmem:[%s744 + $0x10] sm:$0xff] %v714
          %748 = vst [vmem:[%s744 + $0x18] sm:$0xff] %v716
          %749 = vst [vmem:[%s744 + $0x20] sm:$0xff] %v625
          %750 = vst [vmem:[%s744 + $0x28] sm:$0xff] %v627
          %751 = vst [vmem:[%s744 + $0x30] sm:$0xff] %v720
          %752 = vst [vmem:[%s744 + $0x38] sm:$0xff] %v722
          %753 = vst [vmem:[%s744 + $0x40] sm:$0xff] %v631
          %754 = vst [vmem:[%s744 + $0x48] sm:$0xff] %v633
          %755 = vst [vmem:[%s744 + $0x50] sm:$0xff] %v726
          %756 = vst [vmem:[%s744 + $0x58] sm:$0xff] %v728
          %757 = vst [vmem:[%s744 + $0x60] sm:$0xff] %v637
          %758 = vst [vmem:[%s744 + $0x68] sm:$0xff] %v639
          %759 = vst [vmem:[%s744 + $0x70] sm:$0xff] %v732
          %760 = vst [vmem:[%s744 + $0x78] sm:$0xff] %v734
          %761 = vst [vmem:[%s744 + $0x80] sm:$0xff] %v643
          %762 = vst [vmem:[%s744 + $0x88] sm:$0xff] %v645
          %763 = vst [vmem:[%s744 + $0x90] sm:$0xff] %v738
          %764 = vst [vmem:[%s744 + $0x98] sm:$0xff] %v740
        $region64: #{tpu_custom_call.1} parent=47 // pred_fallthru
          _
        %s765 = smul.u32 %s36, 20
        %s766 = smul.addr %s765, 8
        %s767 = scalar_lea.vmem [#allocation6], %s766
        %v768 = vld [vmem:[%s767] sm:$0xff]
        %v769 = vld [vmem:[%s767 + $0x8] sm:$0xff]
        %v770 = vld [vmem:[%s767 + $0x10] sm:$0xff]
        %v771 = vld [vmem:[%s767 + $0x18] sm:$0xff]
        %v772 = vld [vmem:[%s767 + $0x20] sm:$0xff]
        %v773 = vld [vmem:[%s767 + $0x28] sm:$0xff]
        %v774 = vld [vmem:[%s767 + $0x30] sm:$0xff]
        %v775 = vld [vmem:[%s767 + $0x38] sm:$0xff]
        %v776 = vld [vmem:[%s767 + $0x40] sm:$0xff]
        %v777 = vld [vmem:[%s767 + $0x48] sm:$0xff]
        %v778 = vld [vmem:[%s767 + $0x50] sm:$0xff]
        %v779 = vld [vmem:[%s767 + $0x58] sm:$0xff]
        %v780 = vld [vmem:[%s767 + $0x60] sm:$0xff]
        %v781 = vld [vmem:[%s767 + $0x68] sm:$0xff]
        %v782 = vld [vmem:[%s767 + $0x70] sm:$0xff]
        %v783 = vld [vmem:[%s767 + $0x78] sm:$0xff]
        %v784 = vld [vmem:[%s767 + $0x80] sm:$0xff]
        %v785 = vld [vmem:[%s767 + $0x88] sm:$0xff]
        %v786 = vld [vmem:[%s767 + $0x90] sm:$0xff]
        %v787 = vld [vmem:[%s767 + $0x98] sm:$0xff]
        %788 = vxpose.xlu0.b32.start [1/16] %v768, 128
        %789 = vxpose.xlu0.b32.cont [2/16] 0.0, 128
        %790 = vxpose.xlu0.b32.cont [3/16] 0.0, 128
        %791 = vxpose.xlu0.b32.cont [4/16] 0.0, 128
        %792 = vxpose.xlu0.b32.cont [5/16] 0.0, 128
        %793 = vxpose.xlu0.b32.cont [6/16] 0.0, 128
        %794 = vxpose.xlu0.b32.cont [7/16] 0.0, 128
        %795 = vxpose.xlu0.b32.cont [8/16] 0.0, 128
        %796 = vxpose.xlu0.b32.cont [9/16] 0.0, 128
        %797 = vxpose.xlu0.b32.cont [10/16] 0.0, 128
        %798 = vxpose.xlu0.b32.cont [11/16] 0.0, 128
        %799 = vxpose.xlu0.b32.cont [12/16] 0.0, 128
        %800 = vxpose.xlu0.b32.cont [13/16] 0.0, 128
        %801 = vxpose.xlu0.b32.cont [14/16] 0.0, 128
        %802 = vxpose.xlu0.b32.cont [15/16] 0.0, 128
        %803 = vxpose.xlu0.b32.end [16/16] 0.0, 128
        %v804 = vpop.trf.xlu0
        %v805 = vpop.trf.xlu0
        %v806 = vpop.trf.xlu0
        %v807 = vpop.trf.xlu0
        %v808 = vpop.trf.xlu0
        %v809 = vpop.trf.xlu0
        %v810 = vpop.trf.xlu0
        %v811 = vpop.trf.xlu0
        %v812 = vpop.trf.xlu0
        %v813 = vpop.trf.xlu0
        %v814 = vpop.trf.xlu0
        %v815 = vpop.trf.xlu0
        %v816 = vpop.trf.xlu0
        %v817 = vpop.trf.xlu0
        %v818 = vpop.trf.xlu0
        %v819 = vpop.trf.xlu0
        %820 = vxpose.xlu0.b32.start [1/16] %v769, 128
        %821 = vxpose.xlu0.b32.cont [2/16] 0.0, 128
        %822 = vxpose.xlu0.b32.cont [3/16] 0.0, 128
        %823 = vxpose.xlu0.b32.cont [4/16] 0.0, 128
        %824 = vxpose.xlu0.b32.cont [5/16] 0.0, 128
        %825 = vxpose.xlu0.b32.cont [6/16] 0.0, 128
        %826 = vxpose.xlu0.b32.cont [7/16] 0.0, 128
        %827 = vxpose.xlu0.b32.cont [8/16] 0.0, 128
        %828 = vxpose.xlu0.b32.cont [9/16] 0.0, 128
        %829 = vxpose.xlu0.b32.cont [10/16] 0.0, 128
        %830 = vxpose.xlu0.b32.cont [11/16] 0.0, 128
        %831 = vxpose.xlu0.b32.cont [12/16] 0.0, 128
        %832 = vxpose.xlu0.b32.cont [13/16] 0.0, 128
        %833 = vxpose.xlu0.b32.cont [14/16] 0.0, 128
        %834 = vxpose.xlu0.b32.cont [15/16] 0.0, 128
        %835 = vxpose.xlu0.b32.end [16/16] 0.0, 128
        %v836 = vpop.trf.xlu0
        %v837 = vpop.trf.xlu0
        %v838 = vpop.trf.xlu0
        %v839 = vpop.trf.xlu0
        %v840 = vpop.trf.xlu0
        %v841 = vpop.trf.xlu0
        %v842 = vpop.trf.xlu0
        %v843 = vpop.trf.xlu0
        %v844 = vpop.trf.xlu0
        %v845 = vpop.trf.xlu0
        %v846 = vpop.trf.xlu0
        %v847 = vpop.trf.xlu0
        %v848 = vpop.trf.xlu0
        %v849 = vpop.trf.xlu0
        %v850 = vpop.trf.xlu0
        %v851 = vpop.trf.xlu0
        %852 = vxpose.xlu0.b32.start [1/16] %v770, 128
        %853 = vxpose.xlu0.b32.cont [2/16] 0.0, 128
        %854 = vxpose.xlu0.b32.cont [3/16] 0.0, 128
        %855 = vxpose.xlu0.b32.cont [4/16] 0.0, 128
        %856 = vxpose.xlu0.b32.cont [5/16] 0.0, 128
        %857 = vxpose.xlu0.b32.cont [6/16] 0.0, 128
        %858 = vxpose.xlu0.b32.cont [7/16] 0.0, 128
        %859 = vxpose.xlu0.b32.cont [8/16] 0.0, 128
        %860 = vxpose.xlu0.b32.cont [9/16] 0.0, 128
        %861 = vxpose.xlu0.b32.cont [10/16] 0.0, 128
        %862 = vxpose.xlu0.b32.cont [11/16] 0.0, 128
        %863 = vxpose.xlu0.b32.cont [12/16] 0.0, 128
        %864 = vxpose.xlu0.b32.cont [13/16] 0.0, 128
        %865 = vxpose.xlu0.b32.cont [14/16] 0.0, 128
        %866 = vxpose.xlu0.b32.cont [15/16] 0.0, 128
        %867 = vxpose.xlu0.b32.end [16/16] 0.0, 128
        %v868 = vpop.trf.xlu0
        %v869 = vpop.trf.xlu0
        %v870 = vpop.trf.xlu0
        %v871 = vpop.trf.xlu0
        %v872 = vpop.trf.xlu0
        %v873 = vpop.trf.xlu0
        %v874 = vpop.trf.xlu0
        %v875 = vpop.trf.xlu0
        %v876 = vpop.trf.xlu0
        %v877 = vpop.trf.xlu0
        %v878 = vpop.trf.xlu0
        %v879 = vpop.trf.xlu0
        %v880 = vpop.trf.xlu0
        %v881 = vpop.trf.xlu0
        %v882 = vpop.trf.xlu0
        %v883 = vpop.trf.xlu0
        %884 = vxpose.xlu0.b32.start [1/16] %v771, 128
        %885 = vxpose.xlu0.b32.cont [2/16] 0.0, 128
        %886 = vxpose.xlu0.b32.cont [3/16] 0.0, 128
        %887 = vxpose.xlu0.b32.cont [4/16] 0.0, 128
        %888 = vxpose.xlu0.b32.cont [5/16] 0.0, 128
        %889 = vxpose.xlu0.b32.cont [6/16] 0.0, 128
        %890 = vxpose.xlu0.b32.cont [7/16] 0.0, 128
        %891 = vxpose.xlu0.b32.cont [8/16] 0.0, 128
        %892 = vxpose.xlu0.b32.cont [9/16] 0.0, 128
        %893 = vxpose.xlu0.b32.cont [10/16] 0.0, 128
        %894 = vxpose.xlu0.b32.cont [11/16] 0.0, 128
        %895 = vxpose.xlu0.b32.cont [12/16] 0.0, 128
        %896 = vxpose.xlu0.b32.cont [13/16] 0.0, 128
        %897 = vxpose.xlu0.b32.cont [14/16] 0.0, 128
        %898 = vxpose.xlu0.b32.cont [15/16] 0.0, 128
        %899 = vxpose.xlu0.b32.end [16/16] 0.0, 128
        %v900 = vpop.trf.xlu0
        %v901 = vpop.trf.xlu0
        %v902 = vpop.trf.xlu0
        %v903 = vpop.trf.xlu0
        %v904 = vpop.trf.xlu0
        %v905 = vpop.trf.xlu0
        %v906 = vpop.trf.xlu0
        %v907 = vpop.trf.xlu0
        %v908 = vpop.trf.xlu0
        %v909 = vpop.trf.xlu0
        %v910 = vpop.trf.xlu0
        %v911 = vpop.trf.xlu0
        %v912 = vpop.trf.xlu0
        %v913 = vpop.trf.xlu0
        %v914 = vpop.trf.xlu0
        %v915 = vpop.trf.xlu0
        %v916 = vld [vmem:[#allocation2] sm:$0xff]
        %v917 = vld [vmem:[#allocation2 + $0x8] sm:$0xff]
        %vm918 = vcmask 64512
        %v920 = vsel %vm918, %v804, 0
        %v923 = vsel %vm918, %v805, 0
        %v926 = vsel %vm918, %v806, 0
        %v929 = vsel %vm918, %v807, 0
        %v932 = vsel %vm918, %v808, 0
        %v935 = vsel %vm918, %v809, 0
        %v938 = vsel %vm918, %v810, 0
        %v941 = vsel %vm918, %v811, 0
        %v944 = vsel %vm918, %v812, 0
        %v947 = vsel %vm918, %v813, 0
        %v950 = vsel %vm918, %v814, 0
        %v953 = vsel %vm918, %v815, 0
        %v956 = vsel %vm918, %v816, 0
        %v959 = vsel %vm918, %v817, 0
        %v962 = vsel %vm918, %v818, 0
        %v965 = vsel %vm918, %v819, 0
        %v968 = vsel %vm918, %v836, 0
        %v971 = vsel %vm918, %v837, 0
        %v974 = vsel %vm918, %v838, 0
        %v977 = vsel %vm918, %v839, 0
        %v980 = vsel %vm918, %v840, 0
        %v983 = vsel %vm918, %v841, 0
        %v986 = vsel %vm918, %v842, 0
        %v989 = vsel %vm918, %v843, 0
        %v992 = vsel %vm918, %v844, 0
        %v995 = vsel %vm918, %v845, 0
        %v998 = vsel %vm918, %v846, 0
        %v1001 = vsel %vm918, %v847, 0
        %v1004 = vsel %vm918, %v848, 0
        %v1007 = vsel %vm918, %v849, 0
        %v1010 = vsel %vm918, %v850, 0
        %v1013 = vsel %vm918, %v851, 0
        %v1016 = vsel %vm918, %v868, 0
        %v1019 = vsel %vm918, %v869, 0
        %v1022 = vsel %vm918, %v870, 0
        %v1025 = vsel %vm918, %v871, 0
        %v1028 = vsel %vm918, %v872, 0
        %v1031 = vsel %vm918, %v873, 0
        %v1034 = vsel %vm918, %v874, 0
        %v1037 = vsel %vm918, %v875, 0
        %v1040 = vsel %vm918, %v876, 0
        %v1043 = vsel %vm918, %v877, 0
        %v1046 = vsel %vm918, %v878, 0
        %v1049 = vsel %vm918, %v879, 0
        %v1052 = vsel %vm918, %v880, 0
        %v1055 = vsel %vm918, %v881, 0
        %v1058 = vsel %vm918, %v882, 0
        %v1061 = vsel %vm918, %v883, 0
        %v1064 = vsel %vm918, %v900, 0
        %v1067 = vsel %vm918, %v901, 0
        %v1070 = vsel %vm918, %v902, 0
        %v1073 = vsel %vm918, %v903, 0
        %v1076 = vsel %vm918, %v904, 0
        %v1079 = vsel %vm918, %v905, 0
        %v1082 = vsel %vm918, %v906, 0
        %v1085 = vsel %vm918, %v907, 0
        %v1088 = vsel %vm918, %v908, 0
        %v1091 = vsel %vm918, %v909, 0
        %v1094 = vsel %vm918, %v910, 0
        %v1097 = vsel %vm918, %v911, 0
        %v1100 = vsel %vm918, %v912, 0
        %v1103 = vsel %vm918, %v913, 0
        %v1106 = vsel %vm918, %v914, 0
        %v1109 = vsel %vm918, %v915, 0
        %1111 = vmatprep.subr.mxu0 0.0
        %1112 = vmatpush1.msra.mxu0 0.0
        %1113 = vmatprep.subr.mxu0 0.0
        %1114 = vmatpush1.msra.mxu0 0.0
        %1115 = vmatprep.subr.mxu0 0.0
        %1116 = vmatpush1.msra.mxu0 0.0
        %1117 = vmatprep.subr.mxu0 0.0
        %1118 = vmatpush1.msra.mxu0 0.0
        %1119 = vmatprep.subr.mxu0 0.0
        %1120 = vmatpush1.msra.mxu0 0.0
        %1121 = vmatprep.subr.mxu0 0.0
        %1122 = vmatpush1.msra.mxu0 0.0
        %1123 = vmatprep.subr.mxu0 0.0
        %1124 = vmatpush1.msra.mxu0 0.0
        %1125 = vmatprep.subr.mxu0 0.0
        %1126 = vmatpush1.msra.mxu0 0.0
        %1127 = vmatprep.subr.mxu0 0.0
        %1128 = vmatpush1.msra.mxu0 0.0
        %1129 = vmatprep.subr.mxu0 0.0
        %1130 = vmatpush1.msra.mxu0 0.0
        %1131 = vmatprep.subr.mxu0 0.0
        %1132 = vmatpush1.msra.mxu0 0.0
        %1133 = vmatprep.subr.mxu0 0.0
        %1134 = vmatpush1.msra.mxu0 0.0
        %1135 = vmatprep.subr.mxu0 0.0
        %1136 = vmatpush1.msra.mxu0 0.0
        %1137 = vmatprep.subr.mxu0 0.0
        %1138 = vmatpush1.msra.mxu0 0.0
        %1139 = vmatprep.subr.mxu0 0.0
        %1140 = vmatpush1.msra.mxu0 0.0
        %1141 = vmatprep.subr.mxu0 %v917
        %1142 = vmatpush1.msra.mxu0 %v916
        %1143 = vmatprep.subr.mxu0 0.0
        %1144 = vmatpush2.msra.mxu0 0.0
        %1145 = vmatprep.subr.mxu0 0.0
        %1146 = vmatpush2.msra.mxu0 0.0
        %1147 = vmatprep.subr.mxu0 0.0
        %1148 = vmatpush2.msra.mxu0 0.0
        %1149 = vmatprep.subr.mxu0 0.0
        %1150 = vmatpush2.msra.mxu0 0.0
        %1151 = vmatprep.subr.mxu0 0.0
        %1152 = vmatpush2.msra.mxu0 0.0
        %1153 = vmatprep.subr.mxu0 0.0
        %1154 = vmatpush2.msra.mxu0 0.0
        %1155 = vmatprep.subr.mxu0 0.0
        %1156 = vmatpush2.msra.mxu0 0.0
        %1157 = vmatprep.subr.mxu0 0.0
        %1158 = vmatpush2.msra.mxu0 0.0
        %1159 = vmatprep.subr.mxu0 0.0
        %1160 = vmatpush2.msra.mxu0 0.0
        %1161 = vmatprep.subr.mxu0 0.0
        %1162 = vmatpush2.msra.mxu0 0.0
        %1163 = vmatprep.subr.mxu0 0.0
        %1164 = vmatpush2.msra.mxu0 0.0
        %1165 = vmatprep.subr.mxu0 0.0
        %1166 = vmatpush2.msra.mxu0 0.0
        %1167 = vmatprep.subr.mxu0 0.0
        %1168 = vmatpush2.msra.mxu0 0.0
        %1169 = vmatprep.subr.mxu0 0.0
        %1170 = vmatpush2.msra.mxu0 0.0
        %1171 = vmatprep.subr.mxu0 0.0
        %1172 = vmatpush2.msra.mxu0 0.0
        %1173 = vmatprep.subr.mxu0 0.0
        %1174 = vmatpush2.msra.mxu0 0.0
        %1175 = vmatprep.mubr.f32.mxu0 0.0
        %1176 = vmatmul.mubr.f32.gmra.mxu0 %v920
        %v1177 = vpop.f32.mrf.mxu0
        %v1178 = vadd.f32 0.0, %v1177
        %v1179 = vpop.f32.mrf.mxu0
        %v1180 = vadd.f32 0.0, %v1179
        %1181 = vmatprep.mubr.f32.mxu0 0.0
        %1182 = vmatmul.mubr.f32.gmra.mxu0 %v923
        %v1183 = vpop.f32.mrf.mxu0
        %v1184 = vadd.f32 0.0, %v1183
        %v1185 = vpop.f32.mrf.mxu0
        %v1186 = vadd.f32 0.0, %v1185
        %1187 = vmatprep.mubr.f32.mxu0 0.0
        %1188 = vmatmul.mubr.f32.gmra.mxu0 %v926
        %v1189 = vpop.f32.mrf.mxu0
        %v1190 = vadd.f32 0.0, %v1189
        %v1191 = vpop.f32.mrf.mxu0
        %v1192 = vadd.f32 0.0, %v1191
        %1193 = vmatprep.mubr.f32.mxu0 0.0
        %1194 = vmatmul.mubr.f32.gmra.mxu0 %v929
        %v1195 = vpop.f32.mrf.mxu0
        %v1196 = vadd.f32 0.0, %v1195
        %v1197 = vpop.f32.mrf.mxu0
        %v1198 = vadd.f32 0.0, %v1197
        %1199 = vmatprep.mubr.f32.mxu0 0.0
        %1200 = vmatmul.mubr.f32.gmra.mxu0 %v932
        %v1201 = vpop.f32.mrf.mxu0
        %v1202 = vadd.f32 0.0, %v1201
        %v1203 = vpop.f32.mrf.mxu0
        %v1204 = vadd.f32 0.0, %v1203
        %1205 = vmatprep.mubr.f32.mxu0 0.0
        %1206 = vmatmul.mubr.f32.gmra.mxu0 %v935
        %v1207 = vpop.f32.mrf.mxu0
        %v1208 = vadd.f32 0.0, %v1207
        %v1209 = vpop.f32.mrf.mxu0
        %v1210 = vadd.f32 0.0, %v1209
        %1211 = vmatprep.mubr.f32.mxu0 0.0
        %1212 = vmatmul.mubr.f32.gmra.mxu0 %v938
        %v1213 = vpop.f32.mrf.mxu0
        %v1214 = vadd.f32 0.0, %v1213
        %v1215 = vpop.f32.mrf.mxu0
        %v1216 = vadd.f32 0.0, %v1215
        %1217 = vmatprep.mubr.f32.mxu0 0.0
        %1218 = vmatmul.mubr.f32.gmra.mxu0 %v941
        %v1219 = vpop.f32.mrf.mxu0
        %v1220 = vadd.f32 0.0, %v1219
        %v1221 = vpop.f32.mrf.mxu0
        %v1222 = vadd.f32 0.0, %v1221
        %1223 = vmatprep.mubr.f32.mxu0 0.0
        %1224 = vmatmul.mubr.f32.gmra.mxu0 %v944
        %v1225 = vpop.f32.mrf.mxu0
        %v1226 = vadd.f32 0.0, %v1225
        %v1227 = vpop.f32.mrf.mxu0
        %v1228 = vadd.f32 0.0, %v1227
        %1229 = vmatprep.mubr.f32.mxu0 0.0
        %1230 = vmatmul.mubr.f32.gmra.mxu0 %v947
        %v1231 = vpop.f32.mrf.mxu0
        %v1232 = vadd.f32 0.0, %v1231
        %v1233 = vpop.f32.mrf.mxu0
        %v1234 = vadd.f32 0.0, %v1233
        %1235 = vmatprep.mubr.f32.mxu0 0.0
        %1236 = vmatmul.mubr.f32.gmra.mxu0 %v950
        %v1237 = vpop.f32.mrf.mxu0
        %v1238 = vadd.f32 0.0, %v1237
        %v1239 = vpop.f32.mrf.mxu0
        %v1240 = vadd.f32 0.0, %v1239
        %1241 = vmatprep.mubr.f32.mxu0 0.0
        %1242 = vmatmul.mubr.f32.gmra.mxu0 %v953
        %v1243 = vpop.f32.mrf.mxu0
        %v1244 = vadd.f32 0.0, %v1243
        %v1245 = vpop.f32.mrf.mxu0
        %v1246 = vadd.f32 0.0, %v1245
        %1247 = vmatprep.mubr.f32.mxu0 0.0
        %1248 = vmatmul.mubr.f32.gmra.mxu0 %v956
        %v1249 = vpop.f32.mrf.mxu0
        %v1250 = vadd.f32 0.0, %v1249
        %v1251 = vpop.f32.mrf.mxu0
        %v1252 = vadd.f32 0.0, %v1251
        %1253 = vmatprep.mubr.f32.mxu0 0.0
        %1254 = vmatmul.mubr.f32.gmra.mxu0 %v959
        %v1255 = vpop.f32.mrf.mxu0
        %v1256 = vadd.f32 0.0, %v1255
        %v1257 = vpop.f32.mrf.mxu0
        %v1258 = vadd.f32 0.0, %v1257
        %1259 = vmatprep.mubr.f32.mxu0 0.0
        %1260 = vmatmul.mubr.f32.gmra.mxu0 %v962
        %v1261 = vpop.f32.mrf.mxu0
        %v1262 = vadd.f32 0.0, %v1261
        %v1263 = vpop.f32.mrf.mxu0
        %v1264 = vadd.f32 0.0, %v1263
        %1265 = vmatprep.mubr.f32.mxu0 0.0
        %1266 = vmatmul.mubr.f32.gmra.mxu0 %v965
        %v1267 = vpop.f32.mrf.mxu0
        %v1268 = vadd.f32 0.0, %v1267
        %v1269 = vpop.f32.mrf.mxu0
        %v1270 = vadd.f32 0.0, %v1269
        %1271 = vmatprep.mubr.f32.mxu0 0.0
        %1272 = vmatmul.mubr.f32.gmra.mxu0 %v968
        %v1273 = vpop.f32.mrf.mxu0
        %v1274 = vadd.f32 0.0, %v1273
        %v1275 = vpop.f32.mrf.mxu0
        %v1276 = vadd.f32 0.0, %v1275
        %1277 = vmatprep.mubr.f32.mxu0 0.0
        %1278 = vmatmul.mubr.f32.gmra.mxu0 %v971
        %v1279 = vpop.f32.mrf.mxu0
        %v1280 = vadd.f32 0.0, %v1279
        %v1281 = vpop.f32.mrf.mxu0
        %v1282 = vadd.f32 0.0, %v1281
        %1283 = vmatprep.mubr.f32.mxu0 0.0
        %1284 = vmatmul.mubr.f32.gmra.mxu0 %v974
        %v1285 = vpop.f32.mrf.mxu0
        %v1286 = vadd.f32 0.0, %v1285
        %v1287 = vpop.f32.mrf.mxu0
        %v1288 = vadd.f32 0.0, %v1287
        %1289 = vmatprep.mubr.f32.mxu0 0.0
        %1290 = vmatmul.mubr.f32.gmra.mxu0 %v977
        %v1291 = vpop.f32.mrf.mxu0
        %v1292 = vadd.f32 0.0, %v1291
        %v1293 = vpop.f32.mrf.mxu0
        %v1294 = vadd.f32 0.0, %v1293
        %1295 = vmatprep.mubr.f32.mxu0 0.0
        %1296 = vmatmul.mubr.f32.gmra.mxu0 %v980
        %v1297 = vpop.f32.mrf.mxu0
        %v1298 = vadd.f32 0.0, %v1297
        %v1299 = vpop.f32.mrf.mxu0
        %v1300 = vadd.f32 0.0, %v1299
        %1301 = vmatprep.mubr.f32.mxu0 0.0
        %1302 = vmatmul.mubr.f32.gmra.mxu0 %v983
        %v1303 = vpop.f32.mrf.mxu0
        %v1304 = vadd.f32 0.0, %v1303
        %v1305 = vpop.f32.mrf.mxu0
        %v1306 = vadd.f32 0.0, %v1305
        %1307 = vmatprep.mubr.f32.mxu0 0.0
        %1308 = vmatmul.mubr.f32.gmra.mxu0 %v986
        %v1309 = vpop.f32.mrf.mxu0
        %v1310 = vadd.f32 0.0, %v1309
        %v1311 = vpop.f32.mrf.mxu0
        %v1312 = vadd.f32 0.0, %v1311
        %1313 = vmatprep.mubr.f32.mxu0 0.0
        %1314 = vmatmul.mubr.f32.gmra.mxu0 %v989
        %v1315 = vpop.f32.mrf.mxu0
        %v1316 = vadd.f32 0.0, %v1315
        %v1317 = vpop.f32.mrf.mxu0
        %v1318 = vadd.f32 0.0, %v1317
        %1319 = vmatprep.mubr.f32.mxu0 0.0
        %1320 = vmatmul.mubr.f32.gmra.mxu0 %v992
        %v1321 = vpop.f32.mrf.mxu0
        %v1322 = vadd.f32 0.0, %v1321
        %v1323 = vpop.f32.mrf.mxu0
        %v1324 = vadd.f32 0.0, %v1323
        %1325 = vmatprep.mubr.f32.mxu0 0.0
        %1326 = vmatmul.mubr.f32.gmra.mxu0 %v995
        %v1327 = vpop.f32.mrf.mxu0
        %v1328 = vadd.f32 0.0, %v1327
        %v1329 = vpop.f32.mrf.mxu0
        %v1330 = vadd.f32 0.0, %v1329
        %1331 = vmatprep.mubr.f32.mxu0 0.0
        %1332 = vmatmul.mubr.f32.gmra.mxu0 %v998
        %v1333 = vpop.f32.mrf.mxu0
        %v1334 = vadd.f32 0.0, %v1333
        %v1335 = vpop.f32.mrf.mxu0
        %v1336 = vadd.f32 0.0, %v1335
        %1337 = vmatprep.mubr.f32.mxu0 0.0
        %1338 = vmatmul.mubr.f32.gmra.mxu0 %v1001
        %v1339 = vpop.f32.mrf.mxu0
        %v1340 = vadd.f32 0.0, %v1339
        %v1341 = vpop.f32.mrf.mxu0
        %v1342 = vadd.f32 0.0, %v1341
        %1343 = vmatprep.mubr.f32.mxu0 0.0
        %1344 = vmatmul.mubr.f32.gmra.mxu0 %v1004
        %v1345 = vpop.f32.mrf.mxu0
        %v1346 = vadd.f32 0.0, %v1345
        %v1347 = vpop.f32.mrf.mxu0
        %v1348 = vadd.f32 0.0, %v1347
        %1349 = vmatprep.mubr.f32.mxu0 0.0
        %1350 = vmatmul.mubr.f32.gmra.mxu0 %v1007
        %v1351 = vpop.f32.mrf.mxu0
        %v1352 = vadd.f32 0.0, %v1351
        %v1353 = vpop.f32.mrf.mxu0
        %v1354 = vadd.f32 0.0, %v1353
        %1355 = vmatprep.mubr.f32.mxu0 0.0
        %1356 = vmatmul.mubr.f32.gmra.mxu0 %v1010
        %v1357 = vpop.f32.mrf.mxu0
        %v1358 = vadd.f32 0.0, %v1357
        %v1359 = vpop.f32.mrf.mxu0
        %v1360 = vadd.f32 0.0, %v1359
        %1361 = vmatprep.mubr.f32.mxu0 0.0
        %1362 = vmatmul.mubr.f32.gmra.mxu0 %v1013
        %v1363 = vpop.f32.mrf.mxu0
        %v1364 = vadd.f32 0.0, %v1363
        %v1365 = vpop.f32.mrf.mxu0
        %v1366 = vadd.f32 0.0, %v1365
        %1367 = vmatprep.mubr.f32.mxu0 0.0
        %1368 = vmatmul.mubr.f32.gmra.mxu0 %v1016
        %v1369 = vpop.f32.mrf.mxu0
        %v1370 = vadd.f32 0.0, %v1369
        %v1371 = vpop.f32.mrf.mxu0
        %v1372 = vadd.f32 0.0, %v1371
        %1373 = vmatprep.mubr.f32.mxu0 0.0
        %1374 = vmatmul.mubr.f32.gmra.mxu0 %v1019
        %v1375 = vpop.f32.mrf.mxu0
        %v1376 = vadd.f32 0.0, %v1375
        %v1377 = vpop.f32.mrf.mxu0
        %v1378 = vadd.f32 0.0, %v1377
        %1379 = vmatprep.mubr.f32.mxu0 0.0
        %1380 = vmatmul.mubr.f32.gmra.mxu0 %v1022
        %v1381 = vpop.f32.mrf.mxu0
        %v1382 = vadd.f32 0.0, %v1381
        %v1383 = vpop.f32.mrf.mxu0
        %v1384 = vadd.f32 0.0, %v1383
        %1385 = vmatprep.mubr.f32.mxu0 0.0
        %1386 = vmatmul.mubr.f32.gmra.mxu0 %v1025
        %v1387 = vpop.f32.mrf.mxu0
        %v1388 = vadd.f32 0.0, %v1387
        %v1389 = vpop.f32.mrf.mxu0
        %v1390 = vadd.f32 0.0, %v1389
        %1391 = vmatprep.mubr.f32.mxu0 0.0
        %1392 = vmatmul.mubr.f32.gmra.mxu0 %v1028
        %v1393 = vpop.f32.mrf.mxu0
        %v1394 = vadd.f32 0.0, %v1393
        %v1395 = vpop.f32.mrf.mxu0
        %v1396 = vadd.f32 0.0, %v1395
        %1397 = vmatprep.mubr.f32.mxu0 0.0
        %1398 = vmatmul.mubr.f32.gmra.mxu0 %v1031
        %v1399 = vpop.f32.mrf.mxu0
        %v1400 = vadd.f32 0.0, %v1399
        %v1401 = vpop.f32.mrf.mxu0
        %v1402 = vadd.f32 0.0, %v1401
        %1403 = vmatprep.mubr.f32.mxu0 0.0
        %1404 = vmatmul.mubr.f32.gmra.mxu0 %v1034
        %v1405 = vpop.f32.mrf.mxu0
        %v1406 = vadd.f32 0.0, %v1405
        %v1407 = vpop.f32.mrf.mxu0
        %v1408 = vadd.f32 0.0, %v1407
        %1409 = vmatprep.mubr.f32.mxu0 0.0
        %1410 = vmatmul.mubr.f32.gmra.mxu0 %v1037
        %v1411 = vpop.f32.mrf.mxu0
        %v1412 = vadd.f32 0.0, %v1411
        %v1413 = vpop.f32.mrf.mxu0
        %v1414 = vadd.f32 0.0, %v1413
        %1415 = vmatprep.mubr.f32.mxu0 0.0
        %1416 = vmatmul.mubr.f32.gmra.mxu0 %v1040
        %v1417 = vpop.f32.mrf.mxu0
        %v1418 = vadd.f32 0.0, %v1417
        %v1419 = vpop.f32.mrf.mxu0
        %v1420 = vadd.f32 0.0, %v1419
        %1421 = vmatprep.mubr.f32.mxu0 0.0
        %1422 = vmatmul.mubr.f32.gmra.mxu0 %v1043
        %v1423 = vpop.f32.mrf.mxu0
        %v1424 = vadd.f32 0.0, %v1423
        %v1425 = vpop.f32.mrf.mxu0
        %v1426 = vadd.f32 0.0, %v1425
        %1427 = vmatprep.mubr.f32.mxu0 0.0
        %1428 = vmatmul.mubr.f32.gmra.mxu0 %v1046
        %v1429 = vpop.f32.mrf.mxu0
        %v1430 = vadd.f32 0.0, %v1429
        %v1431 = vpop.f32.mrf.mxu0
        %v1432 = vadd.f32 0.0, %v1431
        %1433 = vmatprep.mubr.f32.mxu0 0.0
        %1434 = vmatmul.mubr.f32.gmra.mxu0 %v1049
        %v1435 = vpop.f32.mrf.mxu0
        %v1436 = vadd.f32 0.0, %v1435
        %v1437 = vpop.f32.mrf.mxu0
        %v1438 = vadd.f32 0.0, %v1437
        %1439 = vmatprep.mubr.f32.mxu0 0.0
        %1440 = vmatmul.mubr.f32.gmra.mxu0 %v1052
        %v1441 = vpop.f32.mrf.mxu0
        %v1442 = vadd.f32 0.0, %v1441
        %v1443 = vpop.f32.mrf.mxu0
        %v1444 = vadd.f32 0.0, %v1443
        %1445 = vmatprep.mubr.f32.mxu0 0.0
        %1446 = vmatmul.mubr.f32.gmra.mxu0 %v1055
        %v1447 = vpop.f32.mrf.mxu0
        %v1448 = vadd.f32 0.0, %v1447
        %v1449 = vpop.f32.mrf.mxu0
        %v1450 = vadd.f32 0.0, %v1449
        %1451 = vmatprep.mubr.f32.mxu0 0.0
        %1452 = vmatmul.mubr.f32.gmra.mxu0 %v1058
        %v1453 = vpop.f32.mrf.mxu0
        %v1454 = vadd.f32 0.0, %v1453
        %v1455 = vpop.f32.mrf.mxu0
        %v1456 = vadd.f32 0.0, %v1455
        %1457 = vmatprep.mubr.f32.mxu0 0.0
        %1458 = vmatmul.mubr.f32.gmra.mxu0 %v1061
        %v1459 = vpop.f32.mrf.mxu0
        %v1460 = vadd.f32 0.0, %v1459
        %v1461 = vpop.f32.mrf.mxu0
        %v1462 = vadd.f32 0.0, %v1461
        %1463 = vmatprep.mubr.f32.mxu0 0.0
        %1464 = vmatmul.mubr.f32.gmra.mxu0 %v1064
        %v1465 = vpop.f32.mrf.mxu0
        %v1466 = vadd.f32 0.0, %v1465
        %v1467 = vpop.f32.mrf.mxu0
        %v1468 = vadd.f32 0.0, %v1467
        %1469 = vmatprep.mubr.f32.mxu0 0.0
        %1470 = vmatmul.mubr.f32.gmra.mxu0 %v1067
        %v1471 = vpop.f32.mrf.mxu0
        %v1472 = vadd.f32 0.0, %v1471
        %v1473 = vpop.f32.mrf.mxu0
        %v1474 = vadd.f32 0.0, %v1473
        %1475 = vmatprep.mubr.f32.mxu0 0.0
        %1476 = vmatmul.mubr.f32.gmra.mxu0 %v1070
        %v1477 = vpop.f32.mrf.mxu0
        %v1478 = vadd.f32 0.0, %v1477
        %v1479 = vpop.f32.mrf.mxu0
        %v1480 = vadd.f32 0.0, %v1479
        %1481 = vmatprep.mubr.f32.mxu0 0.0
        %1482 = vmatmul.mubr.f32.gmra.mxu0 %v1073
        %v1483 = vpop.f32.mrf.mxu0
        %v1484 = vadd.f32 0.0, %v1483
        %v1485 = vpop.f32.mrf.mxu0
        %v1486 = vadd.f32 0.0, %v1485
        %1487 = vmatprep.mubr.f32.mxu0 0.0
        %1488 = vmatmul.mubr.f32.gmra.mxu0 %v1076
        %v1489 = vpop.f32.mrf.mxu0
        %v1490 = vadd.f32 0.0, %v1489
        %v1491 = vpop.f32.mrf.mxu0
        %v1492 = vadd.f32 0.0, %v1491
        %1493 = vmatprep.mubr.f32.mxu0 0.0
        %1494 = vmatmul.mubr.f32.gmra.mxu0 %v1079
        %v1495 = vpop.f32.mrf.mxu0
        %v1496 = vadd.f32 0.0, %v1495
        %v1497 = vpop.f32.mrf.mxu0
        %v1498 = vadd.f32 0.0, %v1497
        %1499 = vmatprep.mubr.f32.mxu0 0.0
        %1500 = vmatmul.mubr.f32.gmra.mxu0 %v1082
        %v1501 = vpop.f32.mrf.mxu0
        %v1502 = vadd.f32 0.0, %v1501
        %v1503 = vpop.f32.mrf.mxu0
        %v1504 = vadd.f32 0.0, %v1503
        %1505 = vmatprep.mubr.f32.mxu0 0.0
        %1506 = vmatmul.mubr.f32.gmra.mxu0 %v1085
        %v1507 = vpop.f32.mrf.mxu0
        %v1508 = vadd.f32 0.0, %v1507
        %v1509 = vpop.f32.mrf.mxu0
        %v1510 = vadd.f32 0.0, %v1509
        %1511 = vmatprep.mubr.f32.mxu0 0.0
        %1512 = vmatmul.mubr.f32.gmra.mxu0 %v1088
        %v1513 = vpop.f32.mrf.mxu0
        %v1514 = vadd.f32 0.0, %v1513
        %v1515 = vpop.f32.mrf.mxu0
        %v1516 = vadd.f32 0.0, %v1515
        %1517 = vmatprep.mubr.f32.mxu0 0.0
        %1518 = vmatmul.mubr.f32.gmra.mxu0 %v1091
        %v1519 = vpop.f32.mrf.mxu0
        %v1520 = vadd.f32 0.0, %v1519
        %v1521 = vpop.f32.mrf.mxu0
        %v1522 = vadd.f32 0.0, %v1521
        %1523 = vmatprep.mubr.f32.mxu0 0.0
        %1524 = vmatmul.mubr.f32.gmra.mxu0 %v1094
        %v1525 = vpop.f32.mrf.mxu0
        %v1526 = vadd.f32 0.0, %v1525
        %v1527 = vpop.f32.mrf.mxu0
        %v1528 = vadd.f32 0.0, %v1527
        %1529 = vmatprep.mubr.f32.mxu0 0.0
        %1530 = vmatmul.mubr.f32.gmra.mxu0 %v1097
        %v1531 = vpop.f32.mrf.mxu0
        %v1532 = vadd.f32 0.0, %v1531
        %v1533 = vpop.f32.mrf.mxu0
        %v1534 = vadd.f32 0.0, %v1533
        %1535 = vmatprep.mubr.f32.mxu0 0.0
        %1536 = vmatmul.mubr.f32.gmra.mxu0 %v1100
        %v1537 = vpop.f32.mrf.mxu0
        %v1538 = vadd.f32 0.0, %v1537
        %v1539 = vpop.f32.mrf.mxu0
        %v1540 = vadd.f32 0.0, %v1539
        %1541 = vmatprep.mubr.f32.mxu0 0.0
        %1542 = vmatmul.mubr.f32.gmra.mxu0 %v1103
        %v1543 = vpop.f32.mrf.mxu0
        %v1544 = vadd.f32 0.0, %v1543
        %v1545 = vpop.f32.mrf.mxu0
        %v1546 = vadd.f32 0.0, %v1545
        %1547 = vmatprep.mubr.f32.mxu0 0.0
        %1548 = vmatmul.mubr.f32.gmra.mxu0 %v1106
        %v1549 = vpop.f32.mrf.mxu0
        %v1550 = vadd.f32 0.0, %v1549
        %v1551 = vpop.f32.mrf.mxu0
        %v1552 = vadd.f32 0.0, %v1551
        %1553 = vmatprep.mubr.f32.mxu0 0.0
        %1554 = vmatmul.mubr.f32.gmra.mxu0 %v1109
        %v1555 = vpop.f32.mrf.mxu0
        %v1556 = vadd.f32 0.0, %v1555
        %v1557 = vpop.f32.mrf.mxu0
        %v1558 = vadd.f32 0.0, %v1557
        %1559 = vdwg.mxu0
        %v1560 = vld [vmem:[#allocation3] sm:$0x3]
        %v1561 = vmax.f32 %v1178, %v1190
        %v1562 = vmax.f32 %v1184, %v1196
        %v1563 = vmax.f32 %v1561, %v1202
        %v1564 = vmax.f32 %v1562, %v1208
        %v1565 = vmax.f32 %v1563, %v1214
        %v1566 = vmax.f32 %v1564, %v1220
        %v1567 = vmax.f32 %v1565, %v1226
        %v1568 = vmax.f32 %v1566, %v1232
        %v1569 = vmax.f32 %v1567, %v1238
        %v1570 = vmax.f32 %v1568, %v1244
        %v1571 = vmax.f32 %v1569, %v1250
        %v1572 = vmax.f32 %v1570, %v1256
        %v1573 = vmax.f32 %v1571, %v1262
        %v1574 = vmax.f32 %v1572, %v1268
        %v1575 = vmax.f32 %v1573, %v1274
        %v1576 = vmax.f32 %v1574, %v1280
        %v1577 = vmax.f32 %v1575, %v1286
        %v1578 = vmax.f32 %v1576, %v1292
        %v1579 = vmax.f32 %v1577, %v1298
        %v1580 = vmax.f32 %v1578, %v1304
        %v1581 = vmax.f32 %v1579, %v1310
        %v1582 = vmax.f32 %v1580, %v1316
        %v1583 = vmax.f32 %v1581, %v1322
        %v1584 = vmax.f32 %v1582, %v1328
        %v1585 = vmax.f32 %v1583, %v1334
        %v1586 = vmax.f32 %v1584, %v1340
        %v1587 = vmax.f32 %v1585, %v1346
        %v1588 = vmax.f32 %v1586, %v1352
        %v1589 = vmax.f32 %v1587, %v1358
        %v1590 = vmax.f32 %v1588, %v1364
        %v1591 = vmax.f32 %v1589, %v1370
        %v1592 = vmax.f32 %v1590, %v1376
        %v1593 = vmax.f32 %v1591, %v1382
        %v1594 = vmax.f32 %v1592, %v1388
        %v1595 = vmax.f32 %v1593, %v1394
        %v1596 = vmax.f32 %v1594, %v1400
        %v1597 = vmax.f32 %v1595, %v1406
        %v1598 = vmax.f32 %v1596, %v1412
        %v1599 = vmax.f32 %v1597, %v1418
        %v1600 = vmax.f32 %v1598, %v1424
        %v1601 = vmax.f32 %v1599, %v1430
        %v1602 = vmax.f32 %v1600, %v1436
        %v1603 = vmax.f32 %v1601, %v1442
        %v1604 = vmax.f32 %v1602, %v1448
        %v1605 = vmax.f32 %v1603, %v1454
        %v1606 = vmax.f32 %v1604, %v1460
        %v1607 = vmax.f32 %v1605, %v1466
        %v1608 = vmax.f32 %v1606, %v1472
        %v1609 = vmax.f32 %v1607, %v1478
        %v1610 = vmax.f32 %v1608, %v1484
        %v1611 = vmax.f32 %v1609, %v1490
        %v1612 = vmax.f32 %v1610, %v1496
        %v1613 = vmax.f32 %v1611, %v1502
        %v1614 = vmax.f32 %v1612, %v1508
        %v1615 = vmax.f32 %v1613, %v1514
        %v1616 = vmax.f32 %v1614, %v1520
        %v1617 = vmax.f32 %v1615, %v1526
        %v1618 = vmax.f32 %v1616, %v1532
        %v1619 = vmax.f32 %v1617, %v1538
        %v1620 = vmax.f32 %v1618, %v1544
        %v1621 = vmax.f32 %v1619, %v1550
        %v1622 = vmax.f32 %v1620, %v1556
        %v1623 = vmax.f32 %v1621, %v1622
        %v1624 = vrot.slane %v1623, 4
        %v1625 = vmax.f32 %v1623, %v1624
        %v1626 = vrot.slane %v1625, 2
        %v1627 = vmax.f32 %v1625, %v1626
        %v1628 = vrot.slane %v1627, 1
        %v1629 = vmax.f32 %v1627, %v1628
        %v1630 = vmax.f32 %v1180, %v1192
        %v1631 = vmax.f32 %v1186, %v1198
        %v1632 = vmax.f32 %v1630, %v1204
        %v1633 = vmax.f32 %v1631, %v1210
        %v1634 = vmax.f32 %v1632, %v1216
        %v1635 = vmax.f32 %v1633, %v1222
        %v1636 = vmax.f32 %v1634, %v1228
        %v1637 = vmax.f32 %v1635, %v1234
        %v1638 = vmax.f32 %v1636, %v1240
        %v1639 = vmax.f32 %v1637, %v1246
        %v1640 = vmax.f32 %v1638, %v1252
        %v1641 = vmax.f32 %v1639, %v1258
        %v1642 = vmax.f32 %v1640, %v1264
        %v1643 = vmax.f32 %v1641, %v1270
        %v1644 = vmax.f32 %v1642, %v1276
        %v1645 = vmax.f32 %v1643, %v1282
        %v1646 = vmax.f32 %v1644, %v1288
        %v1647 = vmax.f32 %v1645, %v1294
        %v1648 = vmax.f32 %v1646, %v1300
        %v1649 = vmax.f32 %v1647, %v1306
        %v1650 = vmax.f32 %v1648, %v1312
        %v1651 = vmax.f32 %v1649, %v1318
        %v1652 = vmax.f32 %v1650, %v1324
        %v1653 = vmax.f32 %v1651, %v1330
        %v1654 = vmax.f32 %v1652, %v1336
        %v1655 = vmax.f32 %v1653, %v1342
        %v1656 = vmax.f32 %v1654, %v1348
        %v1657 = vmax.f32 %v1655, %v1354
        %v1658 = vmax.f32 %v1656, %v1360
        %v1659 = vmax.f32 %v1657, %v1366
        %v1660 = vmax.f32 %v1658, %v1372
        %v1661 = vmax.f32 %v1659, %v1378
        %v1662 = vmax.f32 %v1660, %v1384
        %v1663 = vmax.f32 %v1661, %v1390
        %v1664 = vmax.f32 %v1662, %v1396
        %v1665 = vmax.f32 %v1663, %v1402
        %v1666 = vmax.f32 %v1664, %v1408
        %v1667 = vmax.f32 %v1665, %v1414
        %v1668 = vmax.f32 %v1666, %v1420
        %v1669 = vmax.f32 %v1667, %v1426
        %v1670 = vmax.f32 %v1668, %v1432
        %v1671 = vmax.f32 %v1669, %v1438
        %v1672 = vmax.f32 %v1670, %v1444
        %v1673 = vmax.f32 %v1671, %v1450
        %v1674 = vmax.f32 %v1672, %v1456
        %v1675 = vmax.f32 %v1673, %v1462
        %v1676 = vmax.f32 %v1674, %v1468
        %v1677 = vmax.f32 %v1675, %v1474
        %v1678 = vmax.f32 %v1676, %v1480
        %v1679 = vmax.f32 %v1677, %v1486
        %v1680 = vmax.f32 %v1678, %v1492
        %v1681 = vmax.f32 %v1679, %v1498
        %v1682 = vmax.f32 %v1680, %v1504
        %v1683 = vmax.f32 %v1681, %v1510
        %v1684 = vmax.f32 %v1682, %v1516
        %v1685 = vmax.f32 %v1683, %v1522
        %v1686 = vmax.f32 %v1684, %v1528
        %v1687 = vmax.f32 %v1685, %v1534
        %v1688 = vmax.f32 %v1686, %v1540
        %v1689 = vmax.f32 %v1687, %v1546
        %v1690 = vmax.f32 %v1688, %v1552
        %v1691 = vmax.f32 %v1689, %v1558
        %v1692 = vmax.f32 %v1690, %v1691
        %v1693 = vrot.slane %v1692, 4
        %v1694 = vmax.f32 %v1692, %v1693
        %v1695 = vrot.slane %v1694, 2
        %v1696 = vmax.f32 %v1694, %v1695
        %v1697 = vrot.slane %v1696, 1
        %v1698 = vmax.f32 %v1696, %v1697
        %v1701 = vcombine.low %v1629, %v1698
        %v1703 = vunpack.c.l.s4 1966171168
        %v1704 = vunpack.c.0.s8 %v1703
        %v1705 = vlaneseq
        %v1706 = vshrl.u32 %v1705, 7
        %v1707 = vsub.s32 %v1704, %v1706
        %v1708 = vrot.slane %v1701, %v1707
        %v1710 = vunpack.c.l.s4 1966171168
        %v1711 = vunpack.c.0.s8 %v1710
        %v1712 = vlaneseq
        %v1713 = vshrl.u32 %v1712, 7
        %v1714 = vsub.s32 %v1711, %v1713
        %v1715 = vrot.slane %v1708, %v1714
        %v1717 = vmax.f32 %v1560, %v1715
        %v1718 = vsub.f32 %v1560, %v1717
        %v1719 = vmul.f32 %v1718, 1.442695
        %v1720 = vpow.pop %v1719
        %v1722 = vlaneseq
        %v1723 = vshrl.u32 %v1722, 7
        %v1724 = vsub.s32 0, %v1723
        %v1725 = vrot.slane %v1717, %v1724
        %v1726 = vlaneseq
        %v1727 = vshrl.u32 %v1726, 7
        %v1728 = vsub.s32 1, %v1727
        %v1729 = vrot.slane %v1717, %v1728
        %v1732 = vsub.f32 %v1178, %v1725
        %v1733 = vsub.f32 %v1180, %v1729
        %v1734 = vsub.f32 %v1184, %v1725
        %v1735 = vsub.f32 %v1186, %v1729
        %v1736 = vsub.f32 %v1190, %v1725
        %v1737 = vsub.f32 %v1192, %v1729
        %v1738 = vsub.f32 %v1196, %v1725
        %v1739 = vsub.f32 %v1198, %v1729
        %v1740 = vsub.f32 %v1202, %v1725
        %v1741 = vsub.f32 %v1204, %v1729
        %v1742 = vsub.f32 %v1208, %v1725
        %v1743 = vsub.f32 %v1210, %v1729
        %v1744 = vsub.f32 %v1214, %v1725
        %v1745 = vsub.f32 %v1216, %v1729
        %v1746 = vsub.f32 %v1220, %v1725
        %v1747 = vsub.f32 %v1222, %v1729
        %v1748 = vsub.f32 %v1226, %v1725
        %v1749 = vsub.f32 %v1228, %v1729
        %v1750 = vsub.f32 %v1232, %v1725
        %v1751 = vsub.f32 %v1234, %v1729
        %v1752 = vsub.f32 %v1238, %v1725
        %v1753 = vsub.f32 %v1240, %v1729
        %v1754 = vsub.f32 %v1244, %v1725
        %v1755 = vsub.f32 %v1246, %v1729
        %v1756 = vsub.f32 %v1250, %v1725
        %v1757 = vsub.f32 %v1252, %v1729
        %v1758 = vsub.f32 %v1256, %v1725
        %v1759 = vsub.f32 %v1258, %v1729
        %v1760 = vsub.f32 %v1262, %v1725
        %v1761 = vsub.f32 %v1264, %v1729
        %v1762 = vsub.f32 %v1268, %v1725
        %v1763 = vsub.f32 %v1270, %v1729
        %v1764 = vsub.f32 %v1274, %v1725
        %v1765 = vsub.f32 %v1276, %v1729
        %v1766 = vsub.f32 %v1280, %v1725
        %v1767 = vsub.f32 %v1282, %v1729
        %v1768 = vsub.f32 %v1286, %v1725
        %v1769 = vsub.f32 %v1288, %v1729
        %v1770 = vsub.f32 %v1292, %v1725
        %v1771 = vsub.f32 %v1294, %v1729
        %v1772 = vsub.f32 %v1298, %v1725
        %v1773 = vsub.f32 %v1300, %v1729
        %v1774 = vsub.f32 %v1304, %v1725
        %v1775 = vsub.f32 %v1306, %v1729
        %v1776 = vsub.f32 %v1310, %v1725
        %v1777 = vsub.f32 %v1312, %v1729
        %v1778 = vsub.f32 %v1316, %v1725
        %v1779 = vsub.f32 %v1318, %v1729
        %v1780 = vsub.f32 %v1322, %v1725
        %v1781 = vsub.f32 %v1324, %v1729
        %v1782 = vsub.f32 %v1328, %v1725
        %v1783 = vsub.f32 %v1330, %v1729
        %v1784 = vsub.f32 %v1334, %v1725
        %v1785 = vsub.f32 %v1336, %v1729
        %v1786 = vsub.f32 %v1340, %v1725
        %v1787 = vsub.f32 %v1342, %v1729
        %v1788 = vsub.f32 %v1346, %v1725
        %v1789 = vsub.f32 %v1348, %v1729
        %v1790 = vsub.f32 %v1352, %v1725
        %v1791 = vsub.f32 %v1354, %v1729
        %v1792 = vsub.f32 %v1358, %v1725
        %v1793 = vsub.f32 %v1360, %v1729
        %v1794 = vsub.f32 %v1364, %v1725
        %v1795 = vsub.f32 %v1366, %v1729
        %v1796 = vsub.f32 %v1370, %v1725
        %v1797 = vsub.f32 %v1372, %v1729
        %v1798 = vsub.f32 %v1376, %v1725
        %v1799 = vsub.f32 %v1378, %v1729
        %v1800 = vsub.f32 %v1382, %v1725
        %v1801 = vsub.f32 %v1384, %v1729
        %v1802 = vsub.f32 %v1388, %v1725
        %v1803 = vsub.f32 %v1390, %v1729
        %v1804 = vsub.f32 %v1394, %v1725
        %v1805 = vsub.f32 %v1396, %v1729
        %v1806 = vsub.f32 %v1400, %v1725
        %v1807 = vsub.f32 %v1402, %v1729
        %v1808 = vsub.f32 %v1406, %v1725
        %v1809 = vsub.f32 %v1408, %v1729
        %v1810 = vsub.f32 %v1412, %v1725
        %v1811 = vsub.f32 %v1414, %v1729
        %v1812 = vsub.f32 %v1418, %v1725
        %v1813 = vsub.f32 %v1420, %v1729
        %v1814 = vsub.f32 %v1424, %v1725
        %v1815 = vsub.f32 %v1426, %v1729
        %v1816 = vsub.f32 %v1430, %v1725
        %v1817 = vsub.f32 %v1432, %v1729
        %v1818 = vsub.f32 %v1436, %v1725
        %v1819 = vsub.f32 %v1438, %v1729
        %v1820 = vsub.f32 %v1442, %v1725
        %v1821 = vsub.f32 %v1444, %v1729
        %v1822 = vsub.f32 %v1448, %v1725
        %v1823 = vsub.f32 %v1450, %v1729
        %v1824 = vsub.f32 %v1454, %v1725
        %v1825 = vsub.f32 %v1456, %v1729
        %v1826 = vsub.f32 %v1460, %v1725
        %v1827 = vsub.f32 %v1462, %v1729
        %v1828 = vsub.f32 %v1466, %v1725
        %v1829 = vsub.f32 %v1468, %v1729
        %v1830 = vsub.f32 %v1472, %v1725
        %v1831 = vsub.f32 %v1474, %v1729
        %v1832 = vsub.f32 %v1478, %v1725
        %v1833 = vsub.f32 %v1480, %v1729
        %v1834 = vsub.f32 %v1484, %v1725
        %v1835 = vsub.f32 %v1486, %v1729
        %v1836 = vsub.f32 %v1490, %v1725
        %v1837 = vsub.f32 %v1492, %v1729
        %v1838 = vsub.f32 %v1496, %v1725
        %v1839 = vsub.f32 %v1498, %v1729
        %v1840 = vsub.f32 %v1502, %v1725
        %v1841 = vsub.f32 %v1504, %v1729
        %v1842 = vsub.f32 %v1508, %v1725
        %v1843 = vsub.f32 %v1510, %v1729
        %v1844 = vsub.f32 %v1514, %v1725
        %v1845 = vsub.f32 %v1516, %v1729
        %v1846 = vsub.f32 %v1520, %v1725
        %v1847 = vsub.f32 %v1522, %v1729
        %v1848 = vsub.f32 %v1526, %v1725
        %v1849 = vsub.f32 %v1528, %v1729
        %v1850 = vsub.f32 %v1532, %v1725
        %v1851 = vsub.f32 %v1534, %v1729
        %v1852 = vsub.f32 %v1538, %v1725
        %v1853 = vsub.f32 %v1540, %v1729
        %v1854 = vsub.f32 %v1544, %v1725
        %v1855 = vsub.f32 %v1546, %v1729
        %v1856 = vsub.f32 %v1550, %v1725
        %v1857 = vsub.f32 %v1552, %v1729
        %v1858 = vsub.f32 %v1556, %v1725
        %v1859 = vsub.f32 %v1558, %v1729
        %v1860 = vmul.f32 %v1732, 1.442695
        %v1861 = vpow.pop %v1860
        %v1862 = vmul.f32 %v1733, 1.442695
        %v1863 = vpow.pop %v1862
        %v1864 = vmul.f32 %v1734, 1.442695
        %v1865 = vpow.pop %v1864
        %v1866 = vmul.f32 %v1735, 1.442695
        %v1867 = vpow.pop %v1866
        %v1868 = vmul.f32 %v1736, 1.442695
        %v1869 = vpow.pop %v1868
        %v1870 = vmul.f32 %v1737, 1.442695
        %v1871 = vpow.pop %v1870
        %v1872 = vmul.f32 %v1738, 1.442695
        %v1873 = vpow.pop %v1872
        %v1874 = vmul.f32 %v1739, 1.442695
        %v1875 = vpow.pop %v1874
        %v1876 = vmul.f32 %v1740, 1.442695
        %v1877 = vpow.pop %v1876
        %v1878 = vmul.f32 %v1741, 1.442695
        %v1879 = vpow.pop %v1878
        %v1880 = vmul.f32 %v1742, 1.442695
        %v1881 = vpow.pop %v1880
        %v1882 = vmul.f32 %v1743, 1.442695
        %v1883 = vpow.pop %v1882
        %v1884 = vmul.f32 %v1744, 1.442695
        %v1885 = vpow.pop %v1884
        %v1886 = vmul.f32 %v1745, 1.442695
        %v1887 = vpow.pop %v1886
        %v1888 = vmul.f32 %v1746, 1.442695
        %v1889 = vpow.pop %v1888
        %v1890 = vmul.f32 %v1747, 1.442695
        %v1891 = vpow.pop %v1890
        %v1892 = vmul.f32 %v1748, 1.442695
        %v1893 = vpow.pop %v1892
        %v1894 = vmul.f32 %v1749, 1.442695
        %v1895 = vpow.pop %v1894
        %v1896 = vmul.f32 %v1750, 1.442695
        %v1897 = vpow.pop %v1896
        %v1898 = vmul.f32 %v1751, 1.442695
        %v1899 = vpow.pop %v1898
        %v1900 = vmul.f32 %v1752, 1.442695
        %v1901 = vpow.pop %v1900
        %v1902 = vmul.f32 %v1753, 1.442695
        %v1903 = vpow.pop %v1902
        %v1904 = vmul.f32 %v1754, 1.442695
        %v1905 = vpow.pop %v1904
        %v1906 = vmul.f32 %v1755, 1.442695
        %v1907 = vpow.pop %v1906
        %v1908 = vmul.f32 %v1756, 1.442695
        %v1909 = vpow.pop %v1908
        %v1910 = vmul.f32 %v1757, 1.442695
        %v1911 = vpow.pop %v1910
        %v1912 = vmul.f32 %v1758, 1.442695
        %v1913 = vpow.pop %v1912
        %v1914 = vmul.f32 %v1759, 1.442695
        %v1915 = vpow.pop %v1914
        %v1916 = vmul.f32 %v1760, 1.442695
        %v1917 = vpow.pop %v1916
        %v1918 = vmul.f32 %v1761, 1.442695
        %v1919 = vpow.pop %v1918
        %v1920 = vmul.f32 %v1762, 1.442695
        %v1921 = vpow.pop %v1920
        %v1922 = vmul.f32 %v1763, 1.442695
        %v1923 = vpow.pop %v1922
        %v1924 = vmul.f32 %v1764, 1.442695
        %v1925 = vpow.pop %v1924
        %v1926 = vmul.f32 %v1765, 1.442695
        %v1927 = vpow.pop %v1926
        %v1928 = vmul.f32 %v1766, 1.442695
        %v1929 = vpow.pop %v1928
        %v1930 = vmul.f32 %v1767, 1.442695
        %v1931 = vpow.pop %v1930
        %v1932 = vmul.f32 %v1768, 1.442695
        %v1933 = vpow.pop %v1932
        %v1934 = vmul.f32 %v1769, 1.442695
        %v1935 = vpow.pop %v1934
        %v1936 = vmul.f32 %v1770, 1.442695
        %v1937 = vpow.pop %v1936
        %v1938 = vmul.f32 %v1771, 1.442695
        %v1939 = vpow.pop %v1938
        %v1940 = vmul.f32 %v1772, 1.442695
        %v1941 = vpow.pop %v1940
        %v1942 = vmul.f32 %v1773, 1.442695
        %v1943 = vpow.pop %v1942
        %v1944 = vmul.f32 %v1774, 1.442695
        %v1945 = vpow.pop %v1944
        %v1946 = vmul.f32 %v1775, 1.442695
        %v1947 = vpow.pop %v1946
        %v1948 = vmul.f32 %v1776, 1.442695
        %v1949 = vpow.pop %v1948
        %v1950 = vmul.f32 %v1777, 1.442695
        %v1951 = vpow.pop %v1950
        %v1952 = vmul.f32 %v1778, 1.442695
        %v1953 = vpow.pop %v1952
        %v1954 = vmul.f32 %v1779, 1.442695
        %v1955 = vpow.pop %v1954
        %v1956 = vmul.f32 %v1780, 1.442695
        %v1957 = vpow.pop %v1956
        %v1958 = vmul.f32 %v1781, 1.442695
        %v1959 = vpow.pop %v1958
        %v1960 = vmul.f32 %v1782, 1.442695
        %v1961 = vpow.pop %v1960
        %v1962 = vmul.f32 %v1783, 1.442695
        %v1963 = vpow.pop %v1962
        %v1964 = vmul.f32 %v1784, 1.442695
        %v1965 = vpow.pop %v1964
        %v1966 = vmul.f32 %v1785, 1.442695
        %v1967 = vpow.pop %v1966
        %v1968 = vmul.f32 %v1786, 1.442695
        %v1969 = vpow.pop %v1968
        %v1970 = vmul.f32 %v1787, 1.442695
        %v1971 = vpow.pop %v1970
        %v1972 = vmul.f32 %v1788, 1.442695
        %v1973 = vpow.pop %v1972
        %v1974 = vmul.f32 %v1789, 1.442695
        %v1975 = vpow.pop %v1974
        %v1976 = vmul.f32 %v1790, 1.442695
        %v1977 = vpow.pop %v1976
        %v1978 = vmul.f32 %v1791, 1.442695
        %v1979 = vpow.pop %v1978
        %v1980 = vmul.f32 %v1792, 1.442695
        %v1981 = vpow.pop %v1980
        %v1982 = vmul.f32 %v1793, 1.442695
        %v1983 = vpow.pop %v1982
        %v1984 = vmul.f32 %v1794, 1.442695
        %v1985 = vpow.pop %v1984
        %v1986 = vmul.f32 %v1795, 1.442695
        %v1987 = vpow.pop %v1986
        %v1988 = vmul.f32 %v1796, 1.442695
        %v1989 = vpow.pop %v1988
        %v1990 = vmul.f32 %v1797, 1.442695
        %v1991 = vpow.pop %v1990
        %v1992 = vmul.f32 %v1798, 1.442695
        %v1993 = vpow.pop %v1992
        %v1994 = vmul.f32 %v1799, 1.442695
        %v1995 = vpow.pop %v1994
        %v1996 = vmul.f32 %v1800, 1.442695
        %v1997 = vpow.pop %v1996
        %v1998 = vmul.f32 %v1801, 1.442695
        %v1999 = vpow.pop %v1998
        %v2000 = vmul.f32 %v1802, 1.442695
        %v2001 = vpow.pop %v2000
        %v2002 = vmul.f32 %v1803, 1.442695
        %v2003 = vpow.pop %v2002
        %v2004 = vmul.f32 %v1804, 1.442695
        %v2005 = vpow.pop %v2004
        %v2006 = vmul.f32 %v1805, 1.442695
        %v2007 = vpow.pop %v2006
        %v2008 = vmul.f32 %v1806, 1.442695
        %v2009 = vpow.pop %v2008
        %v2010 = vmul.f32 %v1807, 1.442695
        %v2011 = vpow.pop %v2010
        %v2012 = vmul.f32 %v1808, 1.442695
        %v2013 = vpow.pop %v2012
        %v2014 = vmul.f32 %v1809, 1.442695
        %v2015 = vpow.pop %v2014
        %v2016 = vmul.f32 %v1810, 1.442695
        %v2017 = vpow.pop %v2016
        %v2018 = vmul.f32 %v1811, 1.442695
        %v2019 = vpow.pop %v2018
        %v2020 = vmul.f32 %v1812, 1.442695
        %v2021 = vpow.pop %v2020
        %v2022 = vmul.f32 %v1813, 1.442695
        %v2023 = vpow.pop %v2022
        %v2024 = vmul.f32 %v1814, 1.442695
        %v2025 = vpow.pop %v2024
        %v2026 = vmul.f32 %v1815, 1.442695
        %v2027 = vpow.pop %v2026
        %v2028 = vmul.f32 %v1816, 1.442695
        %v2029 = vpow.pop %v2028
        %v2030 = vmul.f32 %v1817, 1.442695
        %v2031 = vpow.pop %v2030
        %v2032 = vmul.f32 %v1818, 1.442695
        %v2033 = vpow.pop %v2032
        %v2034 = vmul.f32 %v1819, 1.442695
        %v2035 = vpow.pop %v2034
        %v2036 = vmul.f32 %v1820, 1.442695
        %v2037 = vpow.pop %v2036
        %v2038 = vmul.f32 %v1821, 1.442695
        %v2039 = vpow.pop %v2038
        %v2040 = vmul.f32 %v1822, 1.442695
        %v2041 = vpow.pop %v2040
        %v2042 = vmul.f32 %v1823, 1.442695
        %v2043 = vpow.pop %v2042
        %v2044 = vmul.f32 %v1824, 1.442695
        %v2045 = vpow.pop %v2044
        %v2046 = vmul.f32 %v1825, 1.442695
        %v2047 = vpow.pop %v2046
        %v2048 = vmul.f32 %v1826, 1.442695
        %v2049 = vpow.pop %v2048
        %v2050 = vmul.f32 %v1827, 1.442695
        %v2051 = vpow.pop %v2050
        %v2052 = vmul.f32 %v1828, 1.442695
        %v2053 = vpow.pop %v2052
        %v2054 = vmul.f32 %v1829, 1.442695
        %v2055 = vpow.pop %v2054
        %v2056 = vmul.f32 %v1830, 1.442695
        %v2057 = vpow.pop %v2056
        %v2058 = vmul.f32 %v1831, 1.442695
        %v2059 = vpow.pop %v2058
        %v2060 = vmul.f32 %v1832, 1.442695
        %v2061 = vpow.pop %v2060
        %v2062 = vmul.f32 %v1833, 1.442695
        %v2063 = vpow.pop %v2062
        %v2064 = vmul.f32 %v1834, 1.442695
        %v2065 = vpow.pop %v2064
        %v2066 = vmul.f32 %v1835, 1.442695
        %v2067 = vpow.pop %v2066
        %v2068 = vmul.f32 %v1836, 1.442695
        %v2069 = vpow.pop %v2068
        %v2070 = vmul.f32 %v1837, 1.442695
        %v2071 = vpow.pop %v2070
        %v2072 = vmul.f32 %v1838, 1.442695
        %v2073 = vpow.pop %v2072
        %v2074 = vmul.f32 %v1839, 1.442695
        %v2075 = vpow.pop %v2074
        %v2076 = vmul.f32 %v1840, 1.442695
        %v2077 = vpow.pop %v2076
        %v2078 = vmul.f32 %v1841, 1.442695
        %v2079 = vpow.pop %v2078
        %v2080 = vmul.f32 %v1842, 1.442695
        %v2081 = vpow.pop %v2080
        %v2082 = vmul.f32 %v1843, 1.442695
        %v2083 = vpow.pop %v2082
        %v2084 = vmul.f32 %v1844, 1.442695
        %v2085 = vpow.pop %v2084
        %v2086 = vmul.f32 %v1845, 1.442695
        %v2087 = vpow.pop %v2086
        %v2088 = vmul.f32 %v1846, 1.442695
        %v2089 = vpow.pop %v2088
        %v2090 = vmul.f32 %v1847, 1.442695
        %v2091 = vpow.pop %v2090
        %v2092 = vmul.f32 %v1848, 1.442695
        %v2093 = vpow.pop %v2092
        %v2094 = vmul.f32 %v1849, 1.442695
        %v2095 = vpow.pop %v2094
        %v2096 = vmul.f32 %v1850, 1.442695
        %v2097 = vpow.pop %v2096
        %v2098 = vmul.f32 %v1851, 1.442695
        %v2099 = vpow.pop %v2098
        %v2100 = vmul.f32 %v1852, 1.442695
        %v2101 = vpow.pop %v2100
        %v2102 = vmul.f32 %v1853, 1.442695
        %v2103 = vpow.pop %v2102
        %v2104 = vmul.f32 %v1854, 1.442695
        %v2105 = vpow.pop %v2104
        %v2106 = vmul.f32 %v1855, 1.442695
        %v2107 = vpow.pop %v2106
        %v2108 = vmul.f32 %v1856, 1.442695
        %v2109 = vpow.pop %v2108
        %v2110 = vmul.f32 %v1857, 1.442695
        %v2111 = vpow.pop %v2110
        %v2112 = vmul.f32 %v1858, 1.442695
        %v2113 = vpow.pop %v2112
        %v2114 = vmul.f32 %v1859, 1.442695
        %v2115 = vpow.pop %v2114
        %v2116 = vld [vmem:[#allocation4] sm:$0x3]
        %v2117 = vmul.f32 %v1720, %v2116
        %v2118 = vadd.f32 %v1861, %v1865
        %v2119 = vadd.f32 %v2118, %v1869
        %v2120 = vadd.f32 %v2119, %v1873
        %v2121 = vadd.f32 %v2120, %v1877
        %v2122 = vadd.f32 %v2121, %v1881
        %v2123 = vadd.f32 %v2122, %v1885
        %v2124 = vadd.f32 %v2123, %v1889
        %v2125 = vadd.f32 %v2124, %v1893
        %v2126 = vadd.f32 %v2125, %v1897
        %v2127 = vadd.f32 %v2126, %v1901
        %v2128 = vadd.f32 %v2127, %v1905
        %v2129 = vadd.f32 %v2128, %v1909
        %v2130 = vadd.f32 %v2129, %v1913
        %v2131 = vadd.f32 %v2130, %v1917
        %v2132 = vadd.f32 %v2131, %v1921
        %v2133 = vadd.f32 %v2132, %v1925
        %v2134 = vadd.f32 %v2133, %v1929
        %v2135 = vadd.f32 %v2134, %v1933
        %v2136 = vadd.f32 %v2135, %v1937
        %v2137 = vadd.f32 %v2136, %v1941
        %v2138 = vadd.f32 %v2137, %v1945
        %v2139 = vadd.f32 %v2138, %v1949
        %v2140 = vadd.f32 %v2139, %v1953
        %v2141 = vadd.f32 %v2140, %v1957
        %v2142 = vadd.f32 %v2141, %v1961
        %v2143 = vadd.f32 %v2142, %v1965
        %v2144 = vadd.f32 %v2143, %v1969
        %v2145 = vadd.f32 %v2144, %v1973
        %v2146 = vadd.f32 %v2145, %v1977
        %v2147 = vadd.f32 %v2146, %v1981
        %v2148 = vadd.f32 %v2147, %v1985
        %v2149 = vadd.f32 %v2148, %v1989
        %v2150 = vadd.f32 %v2149, %v1993
        %v2151 = vadd.f32 %v2150, %v1997
        %v2152 = vadd.f32 %v2151, %v2001
        %v2153 = vadd.f32 %v2152, %v2005
        %v2154 = vadd.f32 %v2153, %v2009
        %v2155 = vadd.f32 %v2154, %v2013
        %v2156 = vadd.f32 %v2155, %v2017
        %v2157 = vadd.f32 %v2156, %v2021
        %v2158 = vadd.f32 %v2157, %v2025
        %v2159 = vadd.f32 %v2158, %v2029
        %v2160 = vadd.f32 %v2159, %v2033
        %v2161 = vadd.f32 %v2160, %v2037
        %v2162 = vadd.f32 %v2161, %v2041
        %v2163 = vadd.f32 %v2162, %v2045
        %v2164 = vadd.f32 %v2163, %v2049
        %v2165 = vadd.f32 %v2164, %v2053
        %v2166 = vadd.f32 %v2165, %v2057
        %v2167 = vadd.f32 %v2166, %v2061
        %v2168 = vadd.f32 %v2167, %v2065
        %v2169 = vadd.f32 %v2168, %v2069
        %v2170 = vadd.f32 %v2169, %v2073
        %v2171 = vadd.f32 %v2170, %v2077
        %v2172 = vadd.f32 %v2171, %v2081
        %v2173 = vadd.f32 %v2172, %v2085
        %v2174 = vadd.f32 %v2173, %v2089
        %v2175 = vadd.f32 %v2174, %v2093
        %v2176 = vadd.f32 %v2175, %v2097
        %v2177 = vadd.f32 %v2176, %v2101
        %v2178 = vadd.f32 %v2177, %v2105
        %v2179 = vadd.f32 %v2178, %v2109
        %v2180 = vadd.f32 %v2179, %v2113
        %v2181 = vrot.slane %v2180, 4
        %v2182 = vadd.f32 %v2180, %v2181
        %v2183 = vrot.slane %v2182, 2
        %v2184 = vadd.f32 %v2182, %v2183
        %v2185 = vrot.slane %v2184, 1
        %v2186 = vadd.f32 %v2184, %v2185
        %v2187 = vadd.f32 %v1863, %v1867
        %v2188 = vadd.f32 %v2187, %v1871
        %v2189 = vadd.f32 %v2188, %v1875
        %v2190 = vadd.f32 %v2189, %v1879
        %v2191 = vadd.f32 %v2190, %v1883
        %v2192 = vadd.f32 %v2191, %v1887
        %v2193 = vadd.f32 %v2192, %v1891
        %v2194 = vadd.f32 %v2193, %v1895
        %v2195 = vadd.f32 %v2194, %v1899
        %v2196 = vadd.f32 %v2195, %v1903
        %v2197 = vadd.f32 %v2196, %v1907
        %v2198 = vadd.f32 %v2197, %v1911
        %v2199 = vadd.f32 %v2198, %v1915
        %v2200 = vadd.f32 %v2199, %v1919
        %v2201 = vadd.f32 %v2200, %v1923
        %v2202 = vadd.f32 %v2201, %v1927
        %v2203 = vadd.f32 %v2202, %v1931
        %v2204 = vadd.f32 %v2203, %v1935
        %v2205 = vadd.f32 %v2204, %v1939
        %v2206 = vadd.f32 %v2205, %v1943
        %v2207 = vadd.f32 %v2206, %v1947
        %v2208 = vadd.f32 %v2207, %v1951
        %v2209 = vadd.f32 %v2208, %v1955
        %v2210 = vadd.f32 %v2209, %v1959
        %v2211 = vadd.f32 %v2210, %v1963
        %v2212 = vadd.f32 %v2211, %v1967
        %v2213 = vadd.f32 %v2212, %v1971
        %v2214 = vadd.f32 %v2213, %v1975
        %v2215 = vadd.f32 %v2214, %v1979
        %v2216 = vadd.f32 %v2215, %v1983
        %v2217 = vadd.f32 %v2216, %v1987
        %v2218 = vadd.f32 %v2217, %v1991
        %v2219 = vadd.f32 %v2218, %v1995
        %v2220 = vadd.f32 %v2219, %v1999
        %v2221 = vadd.f32 %v2220, %v2003
        %v2222 = vadd.f32 %v2221, %v2007
        %v2223 = vadd.f32 %v2222, %v2011
        %v2224 = vadd.f32 %v2223, %v2015
        %v2225 = vadd.f32 %v2224, %v2019
        %v2226 = vadd.f32 %v2225, %v2023
        %v2227 = vadd.f32 %v2226, %v2027
        %v2228 = vadd.f32 %v2227, %v2031
        %v2229 = vadd.f32 %v2228, %v2035
        %v2230 = vadd.f32 %v2229, %v2039
        %v2231 = vadd.f32 %v2230, %v2043
        %v2232 = vadd.f32 %v2231, %v2047
        %v2233 = vadd.f32 %v2232, %v2051
        %v2234 = vadd.f32 %v2233, %v2055
        %v2235 = vadd.f32 %v2234, %v2059
        %v2236 = vadd.f32 %v2235, %v2063
        %v2237 = vadd.f32 %v2236, %v2067
        %v2238 = vadd.f32 %v2237, %v2071
        %v2239 = vadd.f32 %v2238, %v2075
        %v2240 = vadd.f32 %v2239, %v2079
        %v2241 = vadd.f32 %v2240, %v2083
        %v2242 = vadd.f32 %v2241, %v2087
        %v2243 = vadd.f32 %v2242, %v2091
        %v2244 = vadd.f32 %v2243, %v2095
        %v2245 = vadd.f32 %v2244, %v2099
        %v2246 = vadd.f32 %v2245, %v2103
        %v2247 = vadd.f32 %v2246, %v2107
        %v2248 = vadd.f32 %v2247, %v2111
        %v2249 = vadd.f32 %v2248, %v2115
        %v2250 = vrot.slane %v2249, 4
        %v2251 = vadd.f32 %v2249, %v2250
        %v2252 = vrot.slane %v2251, 2
        %v2253 = vadd.f32 %v2251, %v2252
        %v2254 = vrot.slane %v2253, 1
        %v2255 = vadd.f32 %v2253, %v2254
        %v2258 = vcombine.low %v2186, %v2255
        %v2260 = vunpack.c.l.s4 1966171168
        %v2261 = vunpack.c.0.s8 %v2260
        %v2262 = vlaneseq
        %v2263 = vshrl.u32 %v2262, 7
        %v2264 = vsub.s32 %v2261, %v2263
        %v2265 = vrot.slane %v2258, %v2264
        %v2267 = vunpack.c.l.s4 1966171168
        %v2268 = vunpack.c.0.s8 %v2267
        %v2269 = vlaneseq
        %v2270 = vshrl.u32 %v2269, 7
        %v2271 = vsub.s32 %v2268, %v2270
        %v2272 = vrot.slane %v2265, %v2271
        %v2274 = vadd.f32 %v2117, %v2272
        %v2275 = vlaneseq
        %vm2276 = vcmp.ge.s32.totalorder %v2275, 0
        %vm2277 = vcmp.lt.s32.totalorder %v2275, 256
        %vm2278 = vmand %vm2276, %vm2277
        %2279 = vst.msk [vmem:[#allocation4] sm:$0x3] %vm2278, %v2274
        %2280 = vmatprep.subr.mxu0 %v1923
        %2281 = vmatpush1.msra.mxu0 %v1921
        %2282 = vmatprep.subr.mxu0 %v1919
        %2283 = vmatpush1.msra.mxu0 %v1917
        %2284 = vmatprep.subr.mxu0 %v1915
        %2285 = vmatpush1.msra.mxu0 %v1913
        %2286 = vmatprep.subr.mxu0 %v1911
        %2287 = vmatpush1.msra.mxu0 %v1909
        %2288 = vmatprep.subr.mxu0 %v1907
        %2289 = vmatpush1.msra.mxu0 %v1905
        %2290 = vmatprep.subr.mxu0 %v1903
        %2291 = vmatpush1.msra.mxu0 %v1901
        %2292 = vmatprep.subr.mxu0 %v1899
        %2293 = vmatpush1.msra.mxu0 %v1897
        %2294 = vmatprep.subr.mxu0 %v1895
        %2295 = vmatpush1.msra.mxu0 %v1893
        %2296 = vmatprep.subr.mxu0 %v1891
        %2297 = vmatpush1.msra.mxu0 %v1889
        %2298 = vmatprep.subr.mxu0 %v1887
        %2299 = vmatpush1.msra.mxu0 %v1885
        %2300 = vmatprep.subr.mxu0 %v1883
        %2301 = vmatpush1.msra.mxu0 %v1881
        %2302 = vmatprep.subr.mxu0 %v1879
        %2303 = vmatpush1.msra.mxu0 %v1877
        %2304 = vmatprep.subr.mxu0 %v1875
        %2305 = vmatpush1.msra.mxu0 %v1873
        %2306 = vmatprep.subr.mxu0 %v1871
        %2307 = vmatpush1.msra.mxu0 %v1869
        %2308 = vmatprep.subr.mxu0 %v1867
        %2309 = vmatpush1.msra.mxu0 %v1865
        %2310 = vmatprep.subr.mxu0 %v1863
        %2311 = vmatpush1.msra.mxu0 %v1861
        %2312 = vmatprep.subr.mxu0 %v1987
        %2313 = vmatpush2.msra.mxu0 %v1985
        %2314 = vmatprep.subr.mxu0 %v1983
        %2315 = vmatpush2.msra.mxu0 %v1981
        %2316 = vmatprep.subr.mxu0 %v1979
        %2317 = vmatpush2.msra.mxu0 %v1977
        %2318 = vmatprep.subr.mxu0 %v1975
        %2319 = vmatpush2.msra.mxu0 %v1973
        %2320 = vmatprep.subr.mxu0 %v1971
        %2321 = vmatpush2.msra.mxu0 %v1969
        %2322 = vmatprep.subr.mxu0 %v1967
        %2323 = vmatpush2.msra.mxu0 %v1965
        %2324 = vmatprep.subr.mxu0 %v1963
        %2325 = vmatpush2.msra.mxu0 %v1961
        %2326 = vmatprep.subr.mxu0 %v1959
        %2327 = vmatpush2.msra.mxu0 %v1957
        %2328 = vmatprep.subr.mxu0 %v1955
        %2329 = vmatpush2.msra.mxu0 %v1953
        %2330 = vmatprep.subr.mxu0 %v1951
        %2331 = vmatpush2.msra.mxu0 %v1949
        %2332 = vmatprep.subr.mxu0 %v1947
        %2333 = vmatpush2.msra.mxu0 %v1945
        %2334 = vmatprep.subr.mxu0 %v1943
        %2335 = vmatpush2.msra.mxu0 %v1941
        %2336 = vmatprep.subr.mxu0 %v1939
        %2337 = vmatpush2.msra.mxu0 %v1937
        %2338 = vmatprep.subr.mxu0 %v1935
        %2339 = vmatpush2.msra.mxu0 %v1933
        %2340 = vmatprep.subr.mxu0 %v1931
        %2341 = vmatpush2.msra.mxu0 %v1929
        %2342 = vmatprep.subr.mxu0 %v1927
        %2343 = vmatpush2.msra.mxu0 %v1925
        %2344 = vmatprep.mubr.f32.mxu0 %v773
        %2345 = vmatmul.mubr.f32.gmra.mxu0 %v772
        %v2346 = vpop.f32.mrf.mxu0
        %v2347 = vadd.f32 0.0, %v2346
        %v2348 = vpop.f32.mrf.mxu0
        %v2349 = vadd.f32 0.0, %v2348
        %2350 = vmatprep.mubr.f32.mxu0 %v777
        %2351 = vmatmul.mubr.f32.gmra.mxu0 %v776
        %v2352 = vpop.f32.mrf.mxu0
        %v2353 = vadd.f32 0.0, %v2352
        %v2354 = vpop.f32.mrf.mxu0
        %v2355 = vadd.f32 0.0, %v2354
        %2356 = vmatprep.mubr.f32.mxu0 %v781
        %2357 = vmatmul.mubr.f32.gmra.mxu0 %v780
        %v2358 = vpop.f32.mrf.mxu0
        %v2359 = vadd.f32 0.0, %v2358
        %v2360 = vpop.f32.mrf.mxu0
        %v2361 = vadd.f32 0.0, %v2360
        %2362 = vmatprep.mubr.f32.mxu0 %v785
        %2363 = vmatmul.mubr.f32.gmra.mxu0 %v784
        %v2364 = vpop.f32.mrf.mxu0
        %v2365 = vadd.f32 0.0, %v2364
        %v2366 = vpop.f32.mrf.mxu0
        %v2367 = vadd.f32 0.0, %v2366
        %2368 = vdwg.mxu0
        %2369 = vmatprep.subr.mxu0 %v2051
        %2370 = vmatpush1.msra.mxu0 %v2049
        %2371 = vmatprep.subr.mxu0 %v2047
        %2372 = vmatpush1.msra.mxu0 %v2045
        %2373 = vmatprep.subr.mxu0 %v2043
        %2374 = vmatpush1.msra.mxu0 %v2041
        %2375 = vmatprep.subr.mxu0 %v2039
        %2376 = vmatpush1.msra.mxu0 %v2037
        %2377 = vmatprep.subr.mxu0 %v2035
        %2378 = vmatpush1.msra.mxu0 %v2033
        %2379 = vmatprep.subr.mxu0 %v2031
        %2380 = vmatpush1.msra.mxu0 %v2029
        %2381 = vmatprep.subr.mxu0 %v2027
        %2382 = vmatpush1.msra.mxu0 %v2025
        %2383 = vmatprep.subr.mxu0 %v2023
        %2384 = vmatpush1.msra.mxu0 %v2021
        %2385 = vmatprep.subr.mxu0 %v2019
        %2386 = vmatpush1.msra.mxu0 %v2017
        %2387 = vmatprep.subr.mxu0 %v2015
        %2388 = vmatpush1.msra.mxu0 %v2013
        %2389 = vmatprep.subr.mxu0 %v2011
        %2390 = vmatpush1.msra.mxu0 %v2009
        %2391 = vmatprep.subr.mxu0 %v2007
        %2392 = vmatpush1.msra.mxu0 %v2005
        %2393 = vmatprep.subr.mxu0 %v2003
        %2394 = vmatpush1.msra.mxu0 %v2001
        %2395 = vmatprep.subr.mxu0 %v1999
        %2396 = vmatpush1.msra.mxu0 %v1997
        %2397 = vmatprep.subr.mxu0 %v1995
        %2398 = vmatpush1.msra.mxu0 %v1993
        %2399 = vmatprep.subr.mxu0 %v1991
        %2400 = vmatpush1.msra.mxu0 %v1989
        %2401 = vmatprep.subr.mxu0 %v2115
        %2402 = vmatpush2.msra.mxu0 %v2113
        %2403 = vmatprep.subr.mxu0 %v2111
        %2404 = vmatpush2.msra.mxu0 %v2109
        %2405 = vmatprep.subr.mxu0 %v2107
        %2406 = vmatpush2.msra.mxu0 %v2105
        %2407 = vmatprep.subr.mxu0 %v2103
        %2408 = vmatpush2.msra.mxu0 %v2101
        %2409 = vmatprep.subr.mxu0 %v2099
        %2410 = vmatpush2.msra.mxu0 %v2097
        %2411 = vmatprep.subr.mxu0 %v2095
        %2412 = vmatpush2.msra.mxu0 %v2093
        %2413 = vmatprep.subr.mxu0 %v2091
        %2414 = vmatpush2.msra.mxu0 %v2089
        %2415 = vmatprep.subr.mxu0 %v2087
        %2416 = vmatpush2.msra.mxu0 %v2085
        %2417 = vmatprep.subr.mxu0 %v2083
        %2418 = vmatpush2.msra.mxu0 %v2081
        %2419 = vmatprep.subr.mxu0 %v2079
        %2420 = vmatpush2.msra.mxu0 %v2077
        %2421 = vmatprep.subr.mxu0 %v2075
        %2422 = vmatpush2.msra.mxu0 %v2073
        %2423 = vmatprep.subr.mxu0 %v2071
        %2424 = vmatpush2.msra.mxu0 %v2069
        %2425 = vmatprep.subr.mxu0 %v2067
        %2426 = vmatpush2.msra.mxu0 %v2065
        %2427 = vmatprep.subr.mxu0 %v2063
        %2428 = vmatpush2.msra.mxu0 %v2061
        %2429 = vmatprep.subr.mxu0 %v2059
        %2430 = vmatpush2.msra.mxu0 %v2057
        %2431 = vmatprep.subr.mxu0 %v2055
        %2432 = vmatpush2.msra.mxu0 %v2053
        %2433 = vmatprep.mubr.f32.mxu0 %v775
        %2434 = vmatmul.mubr.f32.gmra.mxu0 %v774
        %v2435 = vpop.f32.mrf.mxu0
        %v2436 = vadd.f32 %v2347, %v2435
        %v2437 = vpop.f32.mrf.mxu0
        %v2438 = vadd.f32 %v2349, %v2437
        %2439 = vmatprep.mubr.f32.mxu0 %v779
        %2440 = vmatmul.mubr.f32.gmra.mxu0 %v778
        %v2441 = vpop.f32.mrf.mxu0
        %v2442 = vadd.f32 %v2353, %v2441
        %v2443 = vpop.f32.mrf.mxu0
        %v2444 = vadd.f32 %v2355, %v2443
        %2445 = vmatprep.mubr.f32.mxu0 %v783
        %2446 = vmatmul.mubr.f32.gmra.mxu0 %v782
        %v2447 = vpop.f32.mrf.mxu0
        %v2448 = vadd.f32 %v2359, %v2447
        %v2449 = vpop.f32.mrf.mxu0
        %v2450 = vadd.f32 %v2361, %v2449
        %2451 = vmatprep.mubr.f32.mxu0 %v787
        %2452 = vmatmul.mubr.f32.gmra.mxu0 %v786
        %v2453 = vpop.f32.mrf.mxu0
        %v2454 = vadd.f32 %v2365, %v2453
        %v2455 = vpop.f32.mrf.mxu0
        %v2456 = vadd.f32 %v2367, %v2455
        %2457 = vdwg.mxu0
        %v2458 = vld [vmem:[#allocation5] sm:$0xff]
        %v2459 = vld [vmem:[#allocation5 + $0x8] sm:$0xff]
        %v2460 = vld [vmem:[#allocation5 + $0x10] sm:$0xff]
        %v2461 = vld [vmem:[#allocation5 + $0x18] sm:$0xff]
        %v2462 = vld [vmem:[#allocation5 + $0x20] sm:$0xff]
        %v2463 = vld [vmem:[#allocation5 + $0x28] sm:$0xff]
        %v2464 = vld [vmem:[#allocation5 + $0x30] sm:$0xff]
        %v2465 = vld [vmem:[#allocation5 + $0x38] sm:$0xff]
        %v2467 = vlaneseq
        %v2468 = vshrl.u32 %v2467, 7
        %v2469 = vsub.s32 0, %v2468
        %v2470 = vrot.slane %v1720, %v2469
        %v2471 = vlaneseq
        %v2472 = vshrl.u32 %v2471, 7
        %v2473 = vsub.s32 1, %v2472
        %v2474 = vrot.slane %v1720, %v2473
        %v2477 = vmul.f32 %v2470, %v2458
        %v2478 = vmul.f32 %v2474, %v2459
        %v2479 = vmul.f32 %v2470, %v2460
        %v2480 = vmul.f32 %v2474, %v2461
        %v2481 = vmul.f32 %v2470, %v2462
        %v2482 = vmul.f32 %v2474, %v2463
        %v2483 = vmul.f32 %v2470, %v2464
        %v2484 = vmul.f32 %v2474, %v2465
        %v2485 = vadd.f32 %v2477, %v2436
        %v2486 = vadd.f32 %v2478, %v2438
        %v2487 = vadd.f32 %v2479, %v2442
        %v2488 = vadd.f32 %v2480, %v2444
        %v2489 = vadd.f32 %v2481, %v2448
        %v2490 = vadd.f32 %v2482, %v2450
        %v2491 = vadd.f32 %v2483, %v2454
        %v2492 = vadd.f32 %v2484, %v2456
        %2493 = vst [vmem:[#allocation5] sm:$0xff] %v2485
        %2494 = vst [vmem:[#allocation5 + $0x8] sm:$0xff] %v2486
        %2495 = vst [vmem:[#allocation5 + $0x10] sm:$0xff] %v2487
        %2496 = vst [vmem:[#allocation5 + $0x18] sm:$0xff] %v2488
        %2497 = vst [vmem:[#allocation5 + $0x20] sm:$0xff] %v2489
        %2498 = vst [vmem:[#allocation5 + $0x28] sm:$0xff] %v2490
        %2499 = vst [vmem:[#allocation5 + $0x30] sm:$0xff] %v2491
        %2500 = vst [vmem:[#allocation5 + $0x38] sm:$0xff] %v2492
        %2501 = vst.msk [vmem:[#allocation3] sm:$0x3] %vm2278, %v1717
        %p2502 = scmp.eq.s32.totalorder %s36, 1
        // Predicated region
        $region65: #{tpu_custom_call.1} parent=47 // pred_check
          %p2503 = pneg %p2502
        $region66: #{tpu_custom_call.1} parent=47 // pred_check_branch
          %2505 = sbr.rel (%p2503) target = $region68
        $region67: #{tpu_custom_call.1} parent=47 // pred_region
          %v2506 = vld [vmem:[#allocation4] sm:$0x3]
          %v2507 = vrcp.pop %v2506
          %v2508 = vmul.f32 %v2506, %v2507
          %v2509 = vsub.f32 2.0, %v2508
          %v2510 = vmul.f32 %v2507, %v2509
          %v2511 = vld [vmem:[#allocation7] sm:$0x1]
          %v2512 = vld [vmem:[#allocation5] sm:$0xff]
          %v2513 = vld [vmem:[#allocation5 + $0x8] sm:$0xff]
          %v2514 = vld [vmem:[#allocation5 + $0x10] sm:$0xff]
          %v2515 = vld [vmem:[#allocation5 + $0x18] sm:$0xff]
          %v2516 = vld [vmem:[#allocation5 + $0x20] sm:$0xff]
          %v2517 = vld [vmem:[#allocation5 + $0x28] sm:$0xff]
          %v2518 = vld [vmem:[#allocation5 + $0x30] sm:$0xff]
          %v2519 = vld [vmem:[#allocation5 + $0x38] sm:$0xff]
          %v2521 = vlaneseq
          %v2522 = vshrl.u32 %v2521, 7
          %v2523 = vsub.s32 0, %v2522
          %v2524 = vrot.slane %v2510, %v2523
          %v2525 = vlaneseq
          %v2526 = vshrl.u32 %v2525, 7
          %v2527 = vsub.s32 1, %v2526
          %v2528 = vrot.slane %v2510, %v2527
          %v2531 = vmul.f32 %v2512, %v2524
          %v2532 = vmul.f32 %v2513, %v2528
          %v2533 = vmul.f32 %v2514, %v2524
          %v2534 = vmul.f32 %v2515, %v2528
          %v2535 = vmul.f32 %v2516, %v2524
          %v2536 = vmul.f32 %v2517, %v2528
          %v2537 = vmul.f32 %v2518, %v2524
          %v2538 = vmul.f32 %v2519, %v2528
          %v2540 = vlaneseq
          %v2541 = vshrl.u32 %v2540, 7
          %v2542 = vsub.s32 0, %v2541
          %v2543 = vrot.slane %v2511, %v2542
          %2544 = vset.pattern.permute.xlu0 0
          %2545 = vperm.xlu0 %2544, %v2543
          %v2546 = vpop.permute.xlu0 %2545
          %v2548 = vmul.f32 %v2546, %v2531
          %v2549 = vmul.f32 %v2546, %v2532
          %v2550 = vmul.f32 %v2546, %v2533
          %v2551 = vmul.f32 %v2546, %v2534
          %v2552 = vmul.f32 %v2546, %v2535
          %v2553 = vmul.f32 %v2546, %v2536
          %v2554 = vmul.f32 %v2546, %v2537
          %v2555 = vmul.f32 %v2546, %v2538
          %v2556 = vld [vmem:[%s323] sm:$0xff]
          %v2557 = vld [vmem:[%s323 + $0x8] sm:$0xff]
          %v2558 = vld [vmem:[%s323 + $0x10] sm:$0xff]
          %v2559 = vld [vmem:[%s323 + $0x18] sm:$0xff]
          %v2560 = vld [vmem:[%s323 + $0x20] sm:$0xff]
          %v2561 = vld [vmem:[%s323 + $0x28] sm:$0xff]
          %v2562 = vld [vmem:[%s323 + $0x30] sm:$0xff]
          %v2563 = vld [vmem:[%s323 + $0x38] sm:$0xff]
          %v2564 = vadd.f32 %v2548, %v2556
          %v2565 = vadd.f32 %v2549, %v2557
          %v2566 = vadd.f32 %v2550, %v2558
          %v2567 = vadd.f32 %v2551, %v2559
          %v2568 = vadd.f32 %v2552, %v2560
          %v2569 = vadd.f32 %v2553, %v2561
          %v2570 = vadd.f32 %v2554, %v2562
          %v2571 = vadd.f32 %v2555, %v2563
          %2572 = vst [vmem:[%s367] sm:$0xff] %v2564
          %2573 = vst [vmem:[%s367 + $0x8] sm:$0xff] %v2565
          %2574 = vst [vmem:[%s367 + $0x10] sm:$0xff] %v2566
          %2575 = vst [vmem:[%s367 + $0x18] sm:$0xff] %v2567
          %2576 = vst [vmem:[%s367 + $0x20] sm:$0xff] %v2568
          %2577 = vst [vmem:[%s367 + $0x28] sm:$0xff] %v2569
          %2578 = vst [vmem:[%s367 + $0x30] sm:$0xff] %v2570
          %2579 = vst [vmem:[%s367 + $0x38] sm:$0xff] %v2571
        $region68: #{tpu_custom_call.1} parent=47 // pred_fallthru
          _
        %s2580 = sand.u32 %s219, 1
        %s2581 = scalar_lea.sflag [#allocation10], %s2580
        %s2582 = sand.u32 %s219, 1
        %s2583 = smul.addr %s2582, 64
        %s2584 = scalar_lea.vmem [#allocation13], %s2583
        // Predicated region
        $region69: #{tpu_custom_call.1} parent=47 // pred_check
          %p2585 = pneg %p229
        $region70: #{tpu_custom_call.1} parent=47 // pred_check_branch
          %2587 = sbr.rel (%p2585) target = $region72
        $region71: #{tpu_custom_call.1} parent=47 // pred_region
          %s2588 = smul.u32 2, %s35
          %s2590 = ssub.s32 1024, 1024
          %2591 = vsyncadd %s2581, %s2590
          %s2592 = smul.addr %s34, 32
          %s2593 = sadd.s32 %s2588, %s2592
          %s2594 = smul.addr %s2593, 128
          %s2595 = scalar_lea.hbm %s7, %s2594
          %s2596 = sshll.u32 %s2584, 4
          %s2597 = int_to_ptr.vmem [resolvable:$true] %s2596
          %2602 = dma.vmem_to_hbm [thread:$0]  %s2597, 1024, %s2595, %s2581, 256, 1024, 16
        $region72: #{tpu_custom_call.1} parent=47 // pred_fallthru
          _
      $region48: #{tpu_custom_call.1} parent=5 // pred_fallthru
        _
      %p2603 = scmp.le.s32.totalorder 2, %s24
      // Predicated region
      $region73: #{tpu_custom_call.1} parent=5 // pred_check
        %p2604 = pneg %p2603
      $region74: #{tpu_custom_call.1} parent=5 // pred_check_branch
        %2606 = sbr.rel (%p2604) target = $region76
      $region75: #{tpu_custom_call.1} parent=5 // pred_region
        %s2607 = ssub.s32 %s24, 2
        // Predicated region
        $region77: #{tpu_custom_call.1} parent=75 // pred_check
          %p2608 = pneg %p235
        $region78: #{tpu_custom_call.1} parent=75 // pred_check_branch
          %2610 = sbr.rel (%p2608) target = $region80
        $region79: #{tpu_custom_call.1} parent=75 // pred_region
          %s2611 = sand.u32 %s220, 1
          %s2612 = scalar_lea.sflag [#allocation10], %s2611
          %s2613 = sand.u32 %s220, 1
          %s2614 = smul.addr %s2613, 64
          %s2615 = scalar_lea.vmem [#allocation13], %s2614
          %2616 = dma.done %s2612, 1024
        $region80: #{tpu_custom_call.1} parent=75 // pred_fallthru
          _
      $region76: #{tpu_custom_call.1} parent=5 // pred_fallthru
        _
    $region6: #{tpu_custom_call.1} parent=1 // loop_footer
      %s28 = sadd.s32 1, %s24
    $region7: #{tpu_custom_call.1} parent=1 // loop_footer_branch
      %23 = sbr.rel target = $region3
    $region8: #{tpu_custom_call.1} parent=1 // loop_exit
      _
    %2617 = vsyncpa [#allocation9], 1
    %s2618 = scalar_lea.sflag [#allocation9], 1
    %2619 = vsyncpa %s2618, 1
    %2620 = vsyncpa [#allocation12], 1
    %s2621 = scalar_lea.sflag [#allocation12], 1
    %2622 = vsyncpa %s2621, 1
    %2623 = vsyncpa [#allocation10], 1
    %s2624 = scalar_lea.sflag [#allocation10], 1
    %2625 = vsyncpa %s2624, 1

</llo_original>
